<compile_context>
chip_gen: v7x
topology: tpu7x:2x2x1
jax: 0.10.0
libtpu: 0.0.40
codegen_flags: <defaults>
</compile_context>

<pallas_src>
import functools

import jax
import jax.numpy as jnp
from jax.experimental import pallas as pl
from jax.experimental.pallas import tpu as pltpu


def _round_up(x, m):
    return ((x + m - 1) // m) * m


def _num_tensorcores():
    """Best-effort TensorCores-per-chip detection (v7x: 2, v5e/v6e: 1)."""
    try:
        info = pltpu.get_tpu_info()
        for attr in ("num_cores", "num_tensorcores", "tensorcores_per_chip",
                     "cores_per_chip", "core_count"):
            v = getattr(info, attr, None)
            if isinstance(v, int) and v >= 1:
                return min(v, 2)
    except Exception:
        pass
    try:
        v = getattr(jax.devices()[0], "num_cores", None)
        if isinstance(v, int) and v >= 1:
            return min(v, 2)
    except Exception:
        pass
    return 1  # conservative: never split on unknown hardware


def lstm_sentiment_kernel(
        x_ref,                        # (TILE_T*B_TILE, E) bf16 -- one time chunk
        w_ih1_ref, w_hh1_ref, b1_ref,  # (E,4H) bf16, (H,4H) bf16, (1,4H) f32
        w_l2_ref, b2_ref,              # (2H,4H) bf16 (fused ih|hh), (1,4H) f32
        w_out_ref, b_out_ref,          # (H,L) bf16, (1,L) f32
        out_ref,                       # (B_TILE, L) f32
        xg_ref,                        # (TILE_T*B_TILE, 4H) f32 scratch
        h1, c1, h2, c2,                # (B_TILE, H) f32 scratch, carried over chunks
        *, seq_len):
    b_tile, hidden = h1.shape
    tile_t = x_ref.shape[0] // b_tile
    chunk = pl.program_id(1)
    n_chunks = pl.num_programs(1)

    @pl.when(chunk == 0)
    def _():
        h1[...] = jnp.zeros_like(h1)
        c1[...] = jnp.zeros_like(c1)
        h2[...] = jnp.zeros_like(h2)
        c2[...] = jnp.zeros_like(c2)

    # One big MXU matmul: layer-1 input projections for the whole chunk
    # (bias added once here, not per timestep).
    xg_ref[...] = (jnp.dot(x_ref[...], w_ih1_ref[...],
                           preferred_element_type=jnp.float32)
                   + b1_ref[...])

    # Hoist loop-invariant loads / broadcasts out of the time loop (JAX does not
    # CSE broadcast_in_dim).  For large H, keep reads inside the loop instead so
    # full/partial unrolling does not blow the 64-vreg budget.
    hoist_weights = hidden < 128
    w_hh1_h = w_hh1_ref[...] if hoist_weights else None
    w_l2_h = w_l2_ref[...] if hoist_weights else None
    b2_b = jnp.broadcast_to(b2_ref[...], (b_tile, 4 * hidden))

    def gates_to_hc(gates, c_prev):
        # Full-width nonlinearities: one sigmoid + one tanh over (b, 4H), then
        # slice, instead of four quarter-lane transcendental passes.
        H = hidden
        sg = jax.nn.sigmoid(gates)
        tg = jnp.tanh(gates)
        i = sg[:, 0 * H:1 * H]
        f = sg[:, 1 * H:2 * H]
        o = sg[:, 3 * H:4 * H]
        g = tg[:, 2 * H:3 * H]
        c_new = f * c_prev + i * g
        h_new = o * jnp.tanh(c_new)
        return h_new, c_new

    def body(i, carry):
        h1v, c1v, h2v, c2v = carry
        w_hh1 = w_hh1_h if hoist_weights else w_hh1_ref[...]
        w_l2 = w_l2_h if hoist_weights else w_l2_ref[...]

        row0 = pl.multiple_of(i * b_tile, 8)          # sublane-aligned start
        xg_t = xg_ref[pl.ds(row0, b_tile), :]         # (B, 4H) f32
        # Layer 1: only the recurrent matmul remains per step.
        g1 = xg_t + jnp.dot(h1v.astype(jnp.bfloat16), w_hh1,
                            preferred_element_type=jnp.float32)
        h1n, c1n = gates_to_hc(g1, c1v)
        # Layer 2: single fused matmul over concat([h1_new, h2_prev]) (K = 2H).
        x2 = jnp.concatenate([h1n, h2v], axis=-1).astype(jnp.bfloat16)
        g2 = jnp.dot(x2, w_l2, preferred_element_type=jnp.float32) + b2_b
        h2n, c2n = gates_to_hc(g2, c2v)
        # Mask padded timesteps (t >= seq_len) so the carried state stays exact.
        valid = (chunk * tile_t + i) < seq_len
        h1v = jnp.where(valid, h1n, h1v)
        c1v = jnp.where(valid, c1n, c1v)
        h2v = jnp.where(valid, h2n, h2v)
        c2v = jnp.where(valid, c2n, c2v)
        return (h1v, c1v, h2v, c2v)

    unroll = True if tile_t <= 32 else 8
    carry = jax.lax.fori_loop(0, tile_t, body,
                              (h1[...], c1[...], h2[...], c2[...]),
                              unroll=unroll)
    h1[...], c1[...], h2[...], c2[...] = carry

    # Resident-output pattern: same out block across the 'arbitrary' chunk axis;
    # written only on the final chunk.
    @pl.when(chunk == n_chunks - 1)
    def _():
        logits = (jnp.dot(carry[2].astype(jnp.bfloat16), w_out_ref[...],
                          preferred_element_type=jnp.float32)
                  + b_out_ref[...])
        m = jnp.max(logits, axis=-1, keepdims=True)
        s = logits - m
        lse = jnp.log(jnp.sum(jnp.exp(s), axis=-1, keepdims=True))
        out_ref[...] = s - lse


def lstm_sentiment_forward(token_ids, params, *, target_rows=256):
    """token_ids: int32 (seq_len, batch). Returns log-probs (batch, label_size)."""
    seq_len, batch = token_ids.shape
    embed_dim = params["embedding"].shape[1]
    hidden_dim = params["w_hh_l0"].shape[1]
    label_size = params["w_out"].shape[0]

    # --- batch tiling: pad to f32 sublane count; split only when it can pay ---
    padded_batch = max(8, _round_up(batch, 8))
    num_cores = _num_tensorcores()
    n_b_tiles = 1
    if (num_cores > 1
            and padded_batch % (8 * num_cores) == 0
            and padded_batch // num_cores >= 128):
        # Only on real multi-TC chips (v7x) with enough rows per tile; on
        # v5e/v6e splitting would run the serial recurrence twice back-to-back.
        n_b_tiles = num_cores
    b_tile = padded_batch // n_b_tiles

    # --- time chunking: aim for ~target_rows MXU rows per chunk matmul --------
    wanted_t = max(1, -(-target_rows // b_tile))
    wanted_t = min(wanted_t, 64, seq_len)
    n_chunks = -(-seq_len // wanted_t)
    tile_t = -(-seq_len // n_chunks)           # pads the sequence by < n_chunks
    padded_seq = n_chunks * tile_t

    # --- embedding gather (glue) + padding ------------------------------------
    embeds = params["embedding"][token_ids]                       # (S, B, E) f32
    embeds = jnp.pad(embeds, ((0, padded_seq - seq_len),
                              (0, padded_batch - batch), (0, 0))).astype(jnp.bfloat16)
    if n_b_tiles == 1:
        # Zero-copy view: (S_pad, B_pad, E) -> (1, n_chunks, tile_t*B_pad, E).
        embeds_slab = embeds.reshape(1, n_chunks, tile_t * padded_batch, embed_dim)
    else:
        # Rare multi-core split path: needs a real transpose copy.
        embeds_slab = embeds.reshape(n_chunks, tile_t, n_b_tiles, b_tile, embed_dim)
        embeds_slab = embeds_slab.transpose(2, 0, 1, 3, 4).reshape(
            n_b_tiles, n_chunks, tile_t * b_tile, embed_dim)

    # --- weights: pre-transpose on the host (K-major for the MXU), cast bf16 --
    w_ih1 = params["w_ih_l0"].T.astype(jnp.bfloat16)                    # (E, 4H)
    w_hh1 = params["w_hh_l0"].T.astype(jnp.bfloat16)                    # (H, 4H)
    w_l2 = jnp.concatenate([params["w_ih_l1"].T, params["w_hh_l1"].T],
                           axis=0).astype(jnp.bfloat16)                 # (2H, 4H)
    w_out = params["w_out"].T.astype(jnp.bfloat16)                      # (H, L)
    b1 = params["b_l0"].astype(jnp.float32)
    b2 = params["b_l1"].astype(jnp.float32)
    b_out = params["b_out"].astype(jnp.float32)

    def full(a):
        nd = a.ndim
        return pl.BlockSpec(a.shape, lambda b, c, _nd=nd: (0,) * _nd)

    # --- explicit, tight VMEM budget (v7x has only 64 MiB physical) -----------
    weight_bytes = sum(int(a.size) * a.dtype.itemsize
                       for a in (w_ih1, w_hh1, w_l2, w_out, b1, b2, b_out))
    chunk_bytes = tile_t * b_tile * embed_dim * 2
    scratch_bytes = (tile_t * b_tile * 4 * hidden_dim + 4 * b_tile * hidden_dim) * 4
    out_bytes = b_tile * label_size * 4
    est = 2 * (weight_bytes + chunk_bytes + out_bytes) + scratch_bytes
    vmem_limit = int(min(max(2 * est + (4 << 20), 8 << 20), 32 << 20))

    kernel = functools.partial(lstm_sentiment_kernel, seq_len=seq_len)

    out = pl.pallas_call(
        kernel,
        out_shape=jax.ShapeDtypeStruct((padded_batch, label_size), jnp.float32),
        grid_spec=pltpu.PrefetchScalarGridSpec(
            num_scalar_prefetch=0,
            grid=(n_b_tiles, n_chunks),
            in_specs=[
                pl.BlockSpec(
                    (pl.Squeezed(), pl.Squeezed(), tile_t * b_tile, embed_dim),
                    lambda b, c: (b, c, 0, 0)),                   # embeds chunk
                full(w_ih1), full(w_hh1), full(b1),
                full(w_l2), full(b2),
                full(w_out), full(b_out),
            ],
            out_specs=pl.BlockSpec((b_tile, label_size), lambda b, c: (b, 0)),
            scratch_shapes=[
                pltpu.VMEM((tile_t * b_tile, 4 * hidden_dim), jnp.float32),  # xg
                pltpu.VMEM((b_tile, hidden_dim), jnp.float32),   # h1
                pltpu.VMEM((b_tile, hidden_dim), jnp.float32),   # c1
                pltpu.VMEM((b_tile, hidden_dim), jnp.float32),   # h2
                pltpu.VMEM((b_tile, hidden_dim), jnp.float32),   # c2
            ],
        ),
        compiler_params=pltpu.CompilerParams(
            dimension_semantics=("parallel", "arbitrary"),
            vmem_limit_bytes=vmem_limit),
    )(embeds_slab, w_ih1, w_hh1, b1, w_l2, b2, w_out, b_out)

    return out[:batch]


def init_params(key, vocab_size, embed_dim, hidden_dim, label_size):
    ks = jax.random.split(key, 10)
    scale = 0.1
    return {
        "embedding": scale * jax.random.normal(ks[0], (vocab_size, embed_dim), jnp.float32),
        # layer 0: input = embedding_dim
        "w_ih_l0": scale * jax.random.normal(ks[1], (4 * hidden_dim, embed_dim), jnp.float32),
        "w_hh_l0": scale * jax.random.normal(ks[2], (4 * hidden_dim, hidden_dim), jnp.float32),
        # b_ih + b_hh folded into one bias per layer, kept 2D (1, 4H) for TPU layout.
        "b_l0": scale * jax.random.normal(ks[3], (1, 4 * hidden_dim), jnp.float32),
        # layer 1: input = hidden_dim
        "w_ih_l1": scale * jax.random.normal(ks[4], (4 * hidden_dim, hidden_dim), jnp.float32),
        "w_hh_l1": scale * jax.random.normal(ks[5], (4 * hidden_dim, hidden_dim), jnp.float32),
        "b_l1": scale * jax.random.normal(ks[6], (1, 4 * hidden_dim), jnp.float32),
        # hidden2label
        "w_out": scale * jax.random.normal(ks[7], (label_size, hidden_dim), jnp.float32),
        "b_out": scale * jax.random.normal(ks[8], (1, label_size), jnp.float32),
    }


def reference_forward(token_ids, params):
    """Pure-JAX reference mirroring the kernel's math (bf16 MXU operands, f32 acc)."""
    H = params["w_hh_l0"].shape[1]
    batch = token_ids.shape[1]
    embeds = params["embedding"][token_ids].astype(jnp.bfloat16)  # (S, B, E)

    w_ih1 = params["w_ih_l0"].T.astype(jnp.bfloat16)
    w_hh1 = params["w_hh_l0"].T.astype(jnp.bfloat16)
    w_ih2 = params["w_ih_l1"].T.astype(jnp.bfloat16)
    w_hh2 = params["w_hh_l1"].T.astype(jnp.bfloat16)
    w_out = params["w_out"].T.astype(jnp.bfloat16)

    def cell(x_b, h, c, w_ih, w_hh, b):
        gates = (jnp.dot(x_b, w_ih, preferred_element_type=jnp.float32) + b
                 + jnp.dot(h.astype(jnp.bfloat16), w_hh,
                           preferred_element_type=jnp.float32))
        i = jax.nn.sigmoid(gates[:, 0 * H:1 * H])
        f = jax.nn.sigmoid(gates[:, 1 * H:2 * H])
        g = jnp.tanh(gates[:, 2 * H:3 * H])
        o = jax.nn.sigmoid(gates[:, 3 * H:4 * H])
        c_new = f * c + i * g
        h_new = o * jnp.tanh(c_new)
        return h_new, c_new

    h1 = c1 = h2 = c2 = jnp.zeros((batch, H), jnp.float32)

    def step(carry, x_t):
        h1, c1, h2, c2 = carry
        h1, c1 = cell(x_t, h1, c1, w_ih1, w_hh1, params["b_l0"])
        h2, c2 = cell(h1.astype(jnp.bfloat16), h2, c2, w_ih2, w_hh2, params["b_l1"])
        return (h1, c1, h2, c2), None

    (h1, c1, h2, c2), _ = jax.lax.scan(step, (h1, c1, h2, c2), embeds)
    logits = (jnp.dot(h2.astype(jnp.bfloat16), w_out,
                      preferred_element_type=jnp.float32) + params["b_out"])
    return jax.nn.log_softmax(logits, axis=-1)


if __name__ == "__main__":
    # Small shapes consistent with the module's forward.
    seq_len, batch = 8, 4
    vocab_size, embed_dim, hidden_dim, label_size = 50, 16, 32, 4

    key = jax.random.PRNGKey(0)
    k_tok, k_par = jax.random.split(key)
    token_ids = jax.random.randint(k_tok, (seq_len, batch), 0, vocab_size, dtype=jnp.int32)
    params = init_params(k_par, vocab_size, embed_dim, hidden_dim, label_size)

    out = jax.block_until_ready(lstm_sentiment_forward(token_ids, params))
    ref = jax.block_until_ready(reference_forward(token_ids, params))

    assert out.shape == (batch, label_size)
    max_diff = float(jnp.max(jnp.abs(out - ref)))
    assert jnp.allclose(out, ref, atol=2e-3, rtol=2e-3), f"mismatch vs reference (max diff {max_diff})"
    print("KERNEL_OK")
</pallas_src>

<mosaic_0001>
module attributes {stable_mosaic.version = 11 : i64} {
  func.func @lstm_sentiment_kernel(%arg0: i32, %arg1: i32, %arg2: memref<1x1x64x16xbf16, #tpu.memory_space<vmem>>, %arg3: memref<16x128xbf16, #tpu.memory_space<vmem>>, %arg4: memref<32x128xbf16, #tpu.memory_space<vmem>>, %arg5: memref<1x128xf32, #tpu.memory_space<vmem>>, %arg6: memref<64x128xbf16, #tpu.memory_space<vmem>>, %arg7: memref<1x128xf32, #tpu.memory_space<vmem>>, %arg8: memref<32x4xbf16, #tpu.memory_space<vmem>>, %arg9: memref<1x4xf32, #tpu.memory_space<vmem>>, %arg10: memref<8x4xf32, #tpu.memory_space<vmem>>, %arg11: memref<64x128xf32, #tpu.memory_space<vmem>>, %arg12: memref<8x32xf32, #tpu.memory_space<vmem>>, %arg13: memref<8x32xf32, #tpu.memory_space<vmem>>, %arg14: memref<8x32xf32, #tpu.memory_space<vmem>>, %arg15: memref<8x32xf32, #tpu.memory_space<vmem>>) attributes {dimension_semantics = [#tpu.dimension_semantics<parallel>, #tpu.dimension_semantics<arbitrary>], iteration_bounds = array<i64: 1, 1>, scalar_prefetch = 0 : i64, scratch_operands = 5 : i64, tpu.core_type = #tpu.core_type<tc>, window_params = [{transform_indices = @transform_0, window_bounds = array<i64: 1, 1, 64, 16>}, {pipeline_mode = #tpu.pipeline_mode<synchronous>, transform_indices = @transform_1, window_bounds = array<i64: 16, 128>}, {pipeline_mode = #tpu.pipeline_mode<synchronous>, transform_indices = @transform_2, window_bounds = array<i64: 32, 128>}, {pipeline_mode = #tpu.pipeline_mode<synchronous>, transform_indices = @transform_3, window_bounds = array<i64: 1, 128>}, {pipeline_mode = #tpu.pipeline_mode<synchronous>, transform_indices = @transform_4, window_bounds = array<i64: 64, 128>}, {pipeline_mode = #tpu.pipeline_mode<synchronous>, transform_indices = @transform_5, window_bounds = array<i64: 1, 128>}, {pipeline_mode = #tpu.pipeline_mode<synchronous>, transform_indices = @transform_6, window_bounds = array<i64: 32, 4>}, {pipeline_mode = #tpu.pipeline_mode<synchronous>, transform_indices = @transform_7, window_bounds = array<i64: 1, 4>}, {transform_indices = @transform_8, window_bounds = array<i64: 8, 4>}]} {
    %c0_i32 = arith.constant 0 : i32
    %0 = arith.cmpi eq, %arg1, %c0_i32 : i32
    %1 = arith.extui %0 : i1 to i32
    %c0_i32_0 = arith.constant 0 : i32
    %2 = arith.cmpi ne, %1, %c0_i32_0 : i32
    scf.if %2 {
      %cst_99 = arith.constant 0.000000e+00 : f32
      %411 = vector.broadcast %cst_99 : f32 to vector<8x32xf32>
      %c0_100 = arith.constant 0 : index
      %c0_101 = arith.constant 0 : index
      %412 = vector.load %arg12[%c0_100, %c0_101] : memref<8x32xf32, #tpu.memory_space<vmem>>, vector<8x32xf32>
      tpu.vector_store %arg12[%c0_100, %c0_101], %411 {strides = array<i32>} : memref<8x32xf32, #tpu.memory_space<vmem>>, vector<8x32xf32>,
      %cst_102 = arith.constant 0.000000e+00 : f32
      %413 = vector.broadcast %cst_102 : f32 to vector<8x32xf32>
      %c0_103 = arith.constant 0 : index
      %c0_104 = arith.constant 0 : index
      %414 = vector.load %arg13[%c0_103, %c0_104] : memref<8x32xf32, #tpu.memory_space<vmem>>, vector<8x32xf32>
      tpu.vector_store %arg13[%c0_103, %c0_104], %413 {strides = array<i32>} : memref<8x32xf32, #tpu.memory_space<vmem>>, vector<8x32xf32>,
      %cst_105 = arith.constant 0.000000e+00 : f32
      %415 = vector.broadcast %cst_105 : f32 to vector<8x32xf32>
      %c0_106 = arith.constant 0 : index
      %c0_107 = arith.constant 0 : index
      %416 = vector.load %arg14[%c0_106, %c0_107] : memref<8x32xf32, #tpu.memory_space<vmem>>, vector<8x32xf32>
      tpu.vector_store %arg14[%c0_106, %c0_107], %415 {strides = array<i32>} : memref<8x32xf32, #tpu.memory_space<vmem>>, vector<8x32xf32>,
      %cst_108 = arith.constant 0.000000e+00 : f32
      %417 = vector.broadcast %cst_108 : f32 to vector<8x32xf32>
      %c0_109 = arith.constant 0 : index
      %c0_110 = arith.constant 0 : index
      %418 = vector.load %arg15[%c0_109, %c0_110] : memref<8x32xf32, #tpu.memory_space<vmem>>, vector<8x32xf32>
      tpu.vector_store %arg15[%c0_109, %c0_110], %417 {strides = array<i32>} : memref<8x32xf32, #tpu.memory_space<vmem>>, vector<8x32xf32>,
    } else {
    }
    %c0 = arith.constant 0 : index
    %c0_1 = arith.constant 0 : index
    %c0_2 = arith.constant 0 : index
    %c0_3 = arith.constant 0 : index
    %3 = vector.load %arg2[%c0, %c0_1, %c0_2, %c0_3] : memref<1x1x64x16xbf16, #tpu.memory_space<vmem>>, vector<1x1x64x16xbf16>
    %4 = vector.shape_cast %3 : vector<1x1x64x16xbf16> to vector<64x16xbf16>
    %c0_4 = arith.constant 0 : index
    %c0_5 = arith.constant 0 : index
    %5 = vector.load %arg3[%c0_4, %c0_5] : memref<16x128xbf16, #tpu.memory_space<vmem>>, vector<16x128xbf16>
    %cst = arith.constant dense<0.000000e+00> : vector<64x128xf32>
    %6 = tpu.matmul %4, %5, %cst {dimension_numbers = #tpu.dot_dimension_numbers<[1], [0], [0], [1], [0, 0, 1, 1], [], []>} : vector<64x16xbf16>, vector<16x128xbf16>, vector<64x128xf32> -> vector<64x128xf32>
    %c0_6 = arith.constant 0 : index
    %c0_7 = arith.constant 0 : index
    %7 = vector.load %arg5[%c0_6, %c0_7] : memref<1x128xf32, #tpu.memory_space<vmem>>, vector<1x128xf32>
    %8 = vector.broadcast %7 : vector<1x128xf32> to vector<64x128xf32>
    %9 = arith.addf %6, %8 : vector<64x128xf32>
    %c0_8 = arith.constant 0 : index
    %c0_9 = arith.constant 0 : index
    %10 = vector.load %arg11[%c0_8, %c0_9] : memref<64x128xf32, #tpu.memory_space<vmem>>, vector<64x128xf32>
    tpu.vector_store %arg11[%c0_8, %c0_9], %9 {strides = array<i32>} : memref<64x128xf32, #tpu.memory_space<vmem>>, vector<64x128xf32>,
    %c0_10 = arith.constant 0 : index
    %c0_11 = arith.constant 0 : index
    %11 = vector.load %arg4[%c0_10, %c0_11] : memref<32x128xbf16, #tpu.memory_space<vmem>>, vector<32x128xbf16>
    %c0_12 = arith.constant 0 : index
    %c0_13 = arith.constant 0 : index
    %12 = vector.load %arg6[%c0_12, %c0_13] : memref<64x128xbf16, #tpu.memory_space<vmem>>, vector<64x128xbf16>
    %c0_14 = arith.constant 0 : index
    %c0_15 = arith.constant 0 : index
    %13 = vector.load %arg7[%c0_14, %c0_15] : memref<1x128xf32, #tpu.memory_space<vmem>>, vector<1x128xf32>
    %14 = vector.shape_cast %13 : vector<1x128xf32> to vector<1x128xf32>
    %15 = vector.broadcast %14 : vector<1x128xf32> to vector<8x128xf32>
    %c0_16 = arith.constant 0 : index
    %c0_17 = arith.constant 0 : index
    %16 = vector.load %arg12[%c0_16, %c0_17] : memref<8x32xf32, #tpu.memory_space<vmem>>, vector<8x32xf32>
    %c0_18 = arith.constant 0 : index
    %c0_19 = arith.constant 0 : index
    %17 = vector.load %arg13[%c0_18, %c0_19] : memref<8x32xf32, #tpu.memory_space<vmem>>, vector<8x32xf32>
    %c0_20 = arith.constant 0 : index
    %c0_21 = arith.constant 0 : index
    %18 = vector.load %arg14[%c0_20, %c0_21] : memref<8x32xf32, #tpu.memory_space<vmem>>, vector<8x32xf32>
    %c0_22 = arith.constant 0 : index
    %c0_23 = arith.constant 0 : index
    %19 = vector.load %arg15[%c0_22, %c0_23] : memref<8x32xf32, #tpu.memory_space<vmem>>, vector<8x32xf32>
    %c0_i32_24 = arith.constant 0 : i32
    %c8_i32 = arith.constant 8 : i32
    %20 = arith.muli %c0_i32_24, %c8_i32 : i32
    %21 = tpu.assume_multiple %20, 8 : i32
    %22 = arith.index_cast %21 : i32 to index
    %c0_25 = arith.constant 0 : index
    %23 = vector.load %arg11[%22, %c0_25] : memref<64x128xf32, #tpu.memory_space<vmem>>, vector<8x128xf32>
    %24 = arith.truncf %16 : vector<8x32xf32> to vector<8x32xbf16>
    %cst_26 = arith.constant dense<0.000000e+00> : vector<8x128xf32>
    %25 = tpu.matmul %24, %11, %cst_26 {dimension_numbers = #tpu.dot_dimension_numbers<[1], [0], [0], [1], [0, 0, 1, 1], [], []>} : vector<8x32xbf16>, vector<32x128xbf16>, vector<8x128xf32> -> vector<8x128xf32>
    %26 = arith.addf %23, %25 : vector<8x128xf32>
    %27 = arith.negf %26 : vector<8x128xf32>
    %28 = math.exp %27 : vector<8x128xf32>
    %cst_27 = arith.constant 1.000000e+00 : f32
    %29 = vector.broadcast %cst_27 : f32 to vector<8x128xf32>
    %30 = arith.addf %29, %28 : vector<8x128xf32>
    %31 = arith.divf %29, %30 : vector<8x128xf32>
    %32 = math.tanh %26 : vector<8x128xf32>
    %33 = vector.extract_strided_slice %31 {offsets = [0, 0], sizes = [8, 32], strides = [1, 1]} : vector<8x128xf32> to vector<8x32xf32>
    %34 = vector.extract_strided_slice %31 {offsets = [0, 32], sizes = [8, 32], strides = [1, 1]} : vector<8x128xf32> to vector<8x32xf32>
    %35 = vector.extract_strided_slice %31 {offsets = [0, 96], sizes = [8, 32], strides = [1, 1]} : vector<8x128xf32> to vector<8x32xf32>
    %36 = vector.extract_strided_slice %32 {offsets = [0, 64], sizes = [8, 32], strides = [1, 1]} : vector<8x128xf32> to vector<8x32xf32>
    %37 = arith.mulf %34, %17 : vector<8x32xf32>
    %38 = arith.mulf %33, %36 : vector<8x32xf32>
    %39 = arith.addf %37, %38 : vector<8x32xf32>
    %40 = math.tanh %39 : vector<8x32xf32>
    %41 = arith.mulf %35, %40 : vector<8x32xf32>
    %42 = tpu.concatenate %41, %18 in 1 : vector<8x32xf32>, vector<8x32xf32> -> vector<8x64xf32>
    %43 = arith.truncf %42 : vector<8x64xf32> to vector<8x64xbf16>
    %cst_28 = arith.constant dense<0.000000e+00> : vector<8x128xf32>
    %44 = tpu.matmul %43, %12, %cst_28 {dimension_numbers = #tpu.dot_dimension_numbers<[1], [0], [0], [1], [0, 0, 1, 1], [], []>} : vector<8x64xbf16>, vector<64x128xbf16>, vector<8x128xf32> -> vector<8x128xf32>
    %45 = arith.addf %44, %15 : vector<8x128xf32>
    %46 = arith.negf %45 : vector<8x128xf32>
    %47 = math.exp %46 : vector<8x128xf32>
    %cst_29 = arith.constant 1.000000e+00 : f32
    %48 = vector.broadcast %cst_29 : f32 to vector<8x128xf32>
    %49 = arith.addf %48, %47 : vector<8x128xf32>
    %50 = arith.divf %48, %49 : vector<8x128xf32>
    %51 = math.tanh %45 : vector<8x128xf32>
    %52 = vector.extract_strided_slice %50 {offsets = [0, 0], sizes = [8, 32], strides = [1, 1]} : vector<8x128xf32> to vector<8x32xf32>
    %53 = vector.extract_strided_slice %50 {offsets = [0, 32], sizes = [8, 32], strides = [1, 1]} : vector<8x128xf32> to vector<8x32xf32>
    %54 = vector.extract_strided_slice %50 {offsets = [0, 96], sizes = [8, 32], strides = [1, 1]} : vector<8x128xf32> to vector<8x32xf32>
    %55 = vector.extract_strided_slice %51 {offsets = [0, 64], sizes = [8, 32], strides = [1, 1]} : vector<8x128xf32> to vector<8x32xf32>
    %56 = arith.mulf %53, %19 : vector<8x32xf32>
    %57 = arith.mulf %52, %55 : vector<8x32xf32>
    %58 = arith.addf %56, %57 : vector<8x32xf32>
    %59 = math.tanh %58 : vector<8x32xf32>
    %60 = arith.mulf %54, %59 : vector<8x32xf32>
    %c8_i32_30 = arith.constant 8 : i32
    %61 = arith.muli %arg1, %c8_i32_30 : i32
    %62 = arith.addi %61, %c0_i32_24 : i32
    %c8_i32_31 = arith.constant 8 : i32
    %63 = arith.cmpi slt, %62, %c8_i32_31 : i32
    %64 = arith.select %63, %41, %16 : vector<8x32xf32>
    %65 = arith.select %63, %39, %17 : vector<8x32xf32>
    %66 = arith.select %63, %60, %18 : vector<8x32xf32>
    %67 = arith.select %63, %58, %19 : vector<8x32xf32>
    %c1_i32 = arith.constant 1 : i32
    %c8_i32_32 = arith.constant 8 : i32
    %68 = arith.muli %c1_i32, %c8_i32_32 : i32
    %69 = tpu.assume_multiple %68, 8 : i32
    %70 = arith.index_cast %69 : i32 to index
    %c0_33 = arith.constant 0 : index
    %71 = vector.load %arg11[%70, %c0_33] : memref<64x128xf32, #tpu.memory_space<vmem>>, vector<8x128xf32>
    %72 = arith.truncf %64 : vector<8x32xf32> to vector<8x32xbf16>
    %cst_34 = arith.constant dense<0.000000e+00> : vector<8x128xf32>
    %73 = tpu.matmul %72, %11, %cst_34 {dimension_numbers = #tpu.dot_dimension_numbers<[1], [0], [0], [1], [0, 0, 1, 1], [], []>} : vector<8x32xbf16>, vector<32x128xbf16>, vector<8x128xf32> -> vector<8x128xf32>
    %74 = arith.addf %71, %73 : vector<8x128xf32>
    %75 = arith.negf %74 : vector<8x128xf32>
    %76 = math.exp %75 : vector<8x128xf32>
    %cst_35 = arith.constant 1.000000e+00 : f32
    %77 = vector.broadcast %cst_35 : f32 to vector<8x128xf32>
    %78 = arith.addf %77, %76 : vector<8x128xf32>
    %79 = arith.divf %77, %78 : vector<8x128xf32>
    %80 = math.tanh %74 : vector<8x128xf32>
    %81 = vector.extract_strided_slice %79 {offsets = [0, 0], sizes = [8, 32], strides = [1, 1]} : vector<8x128xf32> to vector<8x32xf32>
    %82 = vector.extract_strided_slice %79 {offsets = [0, 32], sizes = [8, 32], strides = [1, 1]} : vector<8x128xf32> to vector<8x32xf32>
    %83 = vector.extract_strided_slice %79 {offsets = [0, 96], sizes = [8, 32], strides = [1, 1]} : vector<8x128xf32> to vector<8x32xf32>
    %84 = vector.extract_strided_slice %80 {offsets = [0, 64], sizes = [8, 32], strides = [1, 1]} : vector<8x128xf32> to vector<8x32xf32>
    %85 = arith.mulf %82, %65 : vector<8x32xf32>
    %86 = arith.mulf %81, %84 : vector<8x32xf32>
    %87 = arith.addf %85, %86 : vector<8x32xf32>
    %88 = math.tanh %87 : vector<8x32xf32>
    %89 = arith.mulf %83, %88 : vector<8x32xf32>
    %90 = tpu.concatenate %89, %66 in 1 : vector<8x32xf32>, vector<8x32xf32> -> vector<8x64xf32>
    %91 = arith.truncf %90 : vector<8x64xf32> to vector<8x64xbf16>
    %cst_36 = arith.constant dense<0.000000e+00> : vector<8x128xf32>
    %92 = tpu.matmul %91, %12, %cst_36 {dimension_numbers = #tpu.dot_dimension_numbers<[1], [0], [0], [1], [0, 0, 1, 1], [], []>} : vector<8x64xbf16>, vector<64x128xbf16>, vector<8x128xf32> -> vector<8x128xf32>
    %93 = arith.addf %92, %15 : vector<8x128xf32>
    %94 = arith.negf %93 : vector<8x128xf32>
    %95 = math.exp %94 : vector<8x128xf32>
    %cst_37 = arith.constant 1.000000e+00 : f32
    %96 = vector.broadcast %cst_37 : f32 to vector<8x128xf32>
    %97 = arith.addf %96, %95 : vector<8x128xf32>
    %98 = arith.divf %96, %97 : vector<8x128xf32>
    %99 = math.tanh %93 : vector<8x128xf32>
    %100 = vector.extract_strided_slice %98 {offsets = [0, 0], sizes = [8, 32], strides = [1, 1]} : vector<8x128xf32> to vector<8x32xf32>
    %101 = vector.extract_strided_slice %98 {offsets = [0, 32], sizes = [8, 32], strides = [1, 1]} : vector<8x128xf32> to vector<8x32xf32>
    %102 = vector.extract_strided_slice %98 {offsets = [0, 96], sizes = [8, 32], strides = [1, 1]} : vector<8x128xf32> to vector<8x32xf32>
    %103 = vector.extract_strided_slice %99 {offsets = [0, 64], sizes = [8, 32], strides = [1, 1]} : vector<8x128xf32> to vector<8x32xf32>
    %104 = arith.mulf %101, %67 : vector<8x32xf32>
    %105 = arith.mulf %100, %103 : vector<8x32xf32>
    %106 = arith.addf %104, %105 : vector<8x32xf32>
    %107 = math.tanh %106 : vector<8x32xf32>
    %108 = arith.mulf %102, %107 : vector<8x32xf32>
    %c8_i32_38 = arith.constant 8 : i32
    %109 = arith.muli %arg1, %c8_i32_38 : i32
    %110 = arith.addi %109, %c1_i32 : i32
    %c8_i32_39 = arith.constant 8 : i32
    %111 = arith.cmpi slt, %110, %c8_i32_39 : i32
    %112 = arith.select %111, %89, %64 : vector<8x32xf32>
    %113 = arith.select %111, %87, %65 : vector<8x32xf32>
    %114 = arith.select %111, %108, %66 : vector<8x32xf32>
    %115 = arith.select %111, %106, %67 : vector<8x32xf32>
    %c2_i32 = arith.constant 2 : i32
    %c8_i32_40 = arith.constant 8 : i32
    %116 = arith.muli %c2_i32, %c8_i32_40 : i32
    %117 = tpu.assume_multiple %116, 8 : i32
    %118 = arith.index_cast %117 : i32 to index
    %c0_41 = arith.constant 0 : index
    %119 = vector.load %arg11[%118, %c0_41] : memref<64x128xf32, #tpu.memory_space<vmem>>, vector<8x128xf32>
    %120 = arith.truncf %112 : vector<8x32xf32> to vector<8x32xbf16>
    %cst_42 = arith.constant dense<0.000000e+00> : vector<8x128xf32>
    %121 = tpu.matmul %120, %11, %cst_42 {dimension_numbers = #tpu.dot_dimension_numbers<[1], [0], [0], [1], [0, 0, 1, 1], [], []>} : vector<8x32xbf16>, vector<32x128xbf16>, vector<8x128xf32> -> vector<8x128xf32>
    %122 = arith.addf %119, %121 : vector<8x128xf32>
    %123 = arith.negf %122 : vector<8x128xf32>
    %124 = math.exp %123 : vector<8x128xf32>
    %cst_43 = arith.constant 1.000000e+00 : f32
    %125 = vector.broadcast %cst_43 : f32 to vector<8x128xf32>
    %126 = arith.addf %125, %124 : vector<8x128xf32>
    %127 = arith.divf %125, %126 : vector<8x128xf32>
    %128 = math.tanh %122 : vector<8x128xf32>
    %129 = vector.extract_strided_slice %127 {offsets = [0, 0], sizes = [8, 32], strides = [1, 1]} : vector<8x128xf32> to vector<8x32xf32>
    %130 = vector.extract_strided_slice %127 {offsets = [0, 32], sizes = [8, 32], strides = [1, 1]} : vector<8x128xf32> to vector<8x32xf32>
    %131 = vector.extract_strided_slice %127 {offsets = [0, 96], sizes = [8, 32], strides = [1, 1]} : vector<8x128xf32> to vector<8x32xf32>
    %132 = vector.extract_strided_slice %128 {offsets = [0, 64], sizes = [8, 32], strides = [1, 1]} : vector<8x128xf32> to vector<8x32xf32>
    %133 = arith.mulf %130, %113 : vector<8x32xf32>
    %134 = arith.mulf %129, %132 : vector<8x32xf32>
    %135 = arith.addf %133, %134 : vector<8x32xf32>
    %136 = math.tanh %135 : vector<8x32xf32>
    %137 = arith.mulf %131, %136 : vector<8x32xf32>
    %138 = tpu.concatenate %137, %114 in 1 : vector<8x32xf32>, vector<8x32xf32> -> vector<8x64xf32>
    %139 = arith.truncf %138 : vector<8x64xf32> to vector<8x64xbf16>
    %cst_44 = arith.constant dense<0.000000e+00> : vector<8x128xf32>
    %140 = tpu.matmul %139, %12, %cst_44 {dimension_numbers = #tpu.dot_dimension_numbers<[1], [0], [0], [1], [0, 0, 1, 1], [], []>} : vector<8x64xbf16>, vector<64x128xbf16>, vector<8x128xf32> -> vector<8x128xf32>
    %141 = arith.addf %140, %15 : vector<8x128xf32>
    %142 = arith.negf %141 : vector<8x128xf32>
    %143 = math.exp %142 : vector<8x128xf32>
    %cst_45 = arith.constant 1.000000e+00 : f32
    %144 = vector.broadcast %cst_45 : f32 to vector<8x128xf32>
    %145 = arith.addf %144, %143 : vector<8x128xf32>
    %146 = arith.divf %144, %145 : vector<8x128xf32>
    %147 = math.tanh %141 : vector<8x128xf32>
    %148 = vector.extract_strided_slice %146 {offsets = [0, 0], sizes = [8, 32], strides = [1, 1]} : vector<8x128xf32> to vector<8x32xf32>
    %149 = vector.extract_strided_slice %146 {offsets = [0, 32], sizes = [8, 32], strides = [1, 1]} : vector<8x128xf32> to vector<8x32xf32>
    %150 = vector.extract_strided_slice %146 {offsets = [0, 96], sizes = [8, 32], strides = [1, 1]} : vector<8x128xf32> to vector<8x32xf32>
    %151 = vector.extract_strided_slice %147 {offsets = [0, 64], sizes = [8, 32], strides = [1, 1]} : vector<8x128xf32> to vector<8x32xf32>
    %152 = arith.mulf %149, %115 : vector<8x32xf32>
    %153 = arith.mulf %148, %151 : vector<8x32xf32>
    %154 = arith.addf %152, %153 : vector<8x32xf32>
    %155 = math.tanh %154 : vector<8x32xf32>
    %156 = arith.mulf %150, %155 : vector<8x32xf32>
    %c8_i32_46 = arith.constant 8 : i32
    %157 = arith.muli %arg1, %c8_i32_46 : i32
    %158 = arith.addi %157, %c2_i32 : i32
    %c8_i32_47 = arith.constant 8 : i32
    %159 = arith.cmpi slt, %158, %c8_i32_47 : i32
    %160 = arith.select %159, %137, %112 : vector<8x32xf32>
    %161 = arith.select %159, %135, %113 : vector<8x32xf32>
    %162 = arith.select %159, %156, %114 : vector<8x32xf32>
    %163 = arith.select %159, %154, %115 : vector<8x32xf32>
    %c3_i32 = arith.constant 3 : i32
    %c8_i32_48 = arith.constant 8 : i32
    %164 = arith.muli %c3_i32, %c8_i32_48 : i32
    %165 = tpu.assume_multiple %164, 8 : i32
    %166 = arith.index_cast %165 : i32 to index
    %c0_49 = arith.constant 0 : index
    %167 = vector.load %arg11[%166, %c0_49] : memref<64x128xf32, #tpu.memory_space<vmem>>, vector<8x128xf32>
    %168 = arith.truncf %160 : vector<8x32xf32> to vector<8x32xbf16>
    %cst_50 = arith.constant dense<0.000000e+00> : vector<8x128xf32>
    %169 = tpu.matmul %168, %11, %cst_50 {dimension_numbers = #tpu.dot_dimension_numbers<[1], [0], [0], [1], [0, 0, 1, 1], [], []>} : vector<8x32xbf16>, vector<32x128xbf16>, vector<8x128xf32> -> vector<8x128xf32>
    %170 = arith.addf %167, %169 : vector<8x128xf32>
    %171 = arith.negf %170 : vector<8x128xf32>
    %172 = math.exp %171 : vector<8x128xf32>
    %cst_51 = arith.constant 1.000000e+00 : f32
    %173 = vector.broadcast %cst_51 : f32 to vector<8x128xf32>
    %174 = arith.addf %173, %172 : vector<8x128xf32>
    %175 = arith.divf %173, %174 : vector<8x128xf32>
    %176 = math.tanh %170 : vector<8x128xf32>
    %177 = vector.extract_strided_slice %175 {offsets = [0, 0], sizes = [8, 32], strides = [1, 1]} : vector<8x128xf32> to vector<8x32xf32>
    %178 = vector.extract_strided_slice %175 {offsets = [0, 32], sizes = [8, 32], strides = [1, 1]} : vector<8x128xf32> to vector<8x32xf32>
    %179 = vector.extract_strided_slice %175 {offsets = [0, 96], sizes = [8, 32], strides = [1, 1]} : vector<8x128xf32> to vector<8x32xf32>
    %180 = vector.extract_strided_slice %176 {offsets = [0, 64], sizes = [8, 32], strides = [1, 1]} : vector<8x128xf32> to vector<8x32xf32>
    %181 = arith.mulf %178, %161 : vector<8x32xf32>
    %182 = arith.mulf %177, %180 : vector<8x32xf32>
    %183 = arith.addf %181, %182 : vector<8x32xf32>
    %184 = math.tanh %183 : vector<8x32xf32>
    %185 = arith.mulf %179, %184 : vector<8x32xf32>
    %186 = tpu.concatenate %185, %162 in 1 : vector<8x32xf32>, vector<8x32xf32> -> vector<8x64xf32>
    %187 = arith.truncf %186 : vector<8x64xf32> to vector<8x64xbf16>
    %cst_52 = arith.constant dense<0.000000e+00> : vector<8x128xf32>
    %188 = tpu.matmul %187, %12, %cst_52 {dimension_numbers = #tpu.dot_dimension_numbers<[1], [0], [0], [1], [0, 0, 1, 1], [], []>} : vector<8x64xbf16>, vector<64x128xbf16>, vector<8x128xf32> -> vector<8x128xf32>
    %189 = arith.addf %188, %15 : vector<8x128xf32>
    %190 = arith.negf %189 : vector<8x128xf32>
    %191 = math.exp %190 : vector<8x128xf32>
    %cst_53 = arith.constant 1.000000e+00 : f32
    %192 = vector.broadcast %cst_53 : f32 to vector<8x128xf32>
    %193 = arith.addf %192, %191 : vector<8x128xf32>
    %194 = arith.divf %192, %193 : vector<8x128xf32>
    %195 = math.tanh %189 : vector<8x128xf32>
    %196 = vector.extract_strided_slice %194 {offsets = [0, 0], sizes = [8, 32], strides = [1, 1]} : vector<8x128xf32> to vector<8x32xf32>
    %197 = vector.extract_strided_slice %194 {offsets = [0, 32], sizes = [8, 32], strides = [1, 1]} : vector<8x128xf32> to vector<8x32xf32>
    %198 = vector.extract_strided_slice %194 {offsets = [0, 96], sizes = [8, 32], strides = [1, 1]} : vector<8x128xf32> to vector<8x32xf32>
    %199 = vector.extract_strided_slice %195 {offsets = [0, 64], sizes = [8, 32], strides = [1, 1]} : vector<8x128xf32> to vector<8x32xf32>
    %200 = arith.mulf %197, %163 : vector<8x32xf32>
    %201 = arith.mulf %196, %199 : vector<8x32xf32>
    %202 = arith.addf %200, %201 : vector<8x32xf32>
    %203 = math.tanh %202 : vector<8x32xf32>
    %204 = arith.mulf %198, %203 : vector<8x32xf32>
    %c8_i32_54 = arith.constant 8 : i32
    %205 = arith.muli %arg1, %c8_i32_54 : i32
    %206 = arith.addi %205, %c3_i32 : i32
    %c8_i32_55 = arith.constant 8 : i32
    %207 = arith.cmpi slt, %206, %c8_i32_55 : i32
    %208 = arith.select %207, %185, %160 : vector<8x32xf32>
    %209 = arith.select %207, %183, %161 : vector<8x32xf32>
    %210 = arith.select %207, %204, %162 : vector<8x32xf32>
    %211 = arith.select %207, %202, %163 : vector<8x32xf32>
    %c4_i32 = arith.constant 4 : i32
    %c8_i32_56 = arith.constant 8 : i32
    %212 = arith.muli %c4_i32, %c8_i32_56 : i32
    %213 = tpu.assume_multiple %212, 8 : i32
    %214 = arith.index_cast %213 : i32 to index
    %c0_57 = arith.constant 0 : index
    %215 = vector.load %arg11[%214, %c0_57] : memref<64x128xf32, #tpu.memory_space<vmem>>, vector<8x128xf32>
    %216 = arith.truncf %208 : vector<8x32xf32> to vector<8x32xbf16>
    %cst_58 = arith.constant dense<0.000000e+00> : vector<8x128xf32>
    %217 = tpu.matmul %216, %11, %cst_58 {dimension_numbers = #tpu.dot_dimension_numbers<[1], [0], [0], [1], [0, 0, 1, 1], [], []>} : vector<8x32xbf16>, vector<32x128xbf16>, vector<8x128xf32> -> vector<8x128xf32>
    %218 = arith.addf %215, %217 : vector<8x128xf32>
    %219 = arith.negf %218 : vector<8x128xf32>
    %220 = math.exp %219 : vector<8x128xf32>
    %cst_59 = arith.constant 1.000000e+00 : f32
    %221 = vector.broadcast %cst_59 : f32 to vector<8x128xf32>
    %222 = arith.addf %221, %220 : vector<8x128xf32>
    %223 = arith.divf %221, %222 : vector<8x128xf32>
    %224 = math.tanh %218 : vector<8x128xf32>
    %225 = vector.extract_strided_slice %223 {offsets = [0, 0], sizes = [8, 32], strides = [1, 1]} : vector<8x128xf32> to vector<8x32xf32>
    %226 = vector.extract_strided_slice %223 {offsets = [0, 32], sizes = [8, 32], strides = [1, 1]} : vector<8x128xf32> to vector<8x32xf32>
    %227 = vector.extract_strided_slice %223 {offsets = [0, 96], sizes = [8, 32], strides = [1, 1]} : vector<8x128xf32> to vector<8x32xf32>
    %228 = vector.extract_strided_slice %224 {offsets = [0, 64], sizes = [8, 32], strides = [1, 1]} : vector<8x128xf32> to vector<8x32xf32>
    %229 = arith.mulf %226, %209 : vector<8x32xf32>
    %230 = arith.mulf %225, %228 : vector<8x32xf32>
    %231 = arith.addf %229, %230 : vector<8x32xf32>
    %232 = math.tanh %231 : vector<8x32xf32>
    %233 = arith.mulf %227, %232 : vector<8x32xf32>
    %234 = tpu.concatenate %233, %210 in 1 : vector<8x32xf32>, vector<8x32xf32> -> vector<8x64xf32>
    %235 = arith.truncf %234 : vector<8x64xf32> to vector<8x64xbf16>
    %cst_60 = arith.constant dense<0.000000e+00> : vector<8x128xf32>
    %236 = tpu.matmul %235, %12, %cst_60 {dimension_numbers = #tpu.dot_dimension_numbers<[1], [0], [0], [1], [0, 0, 1, 1], [], []>} : vector<8x64xbf16>, vector<64x128xbf16>, vector<8x128xf32> -> vector<8x128xf32>
    %237 = arith.addf %236, %15 : vector<8x128xf32>
    %238 = arith.negf %237 : vector<8x128xf32>
    %239 = math.exp %238 : vector<8x128xf32>
    %cst_61 = arith.constant 1.000000e+00 : f32
    %240 = vector.broadcast %cst_61 : f32 to vector<8x128xf32>
    %241 = arith.addf %240, %239 : vector<8x128xf32>
    %242 = arith.divf %240, %241 : vector<8x128xf32>
    %243 = math.tanh %237 : vector<8x128xf32>
    %244 = vector.extract_strided_slice %242 {offsets = [0, 0], sizes = [8, 32], strides = [1, 1]} : vector<8x128xf32> to vector<8x32xf32>
    %245 = vector.extract_strided_slice %242 {offsets = [0, 32], sizes = [8, 32], strides = [1, 1]} : vector<8x128xf32> to vector<8x32xf32>
    %246 = vector.extract_strided_slice %242 {offsets = [0, 96], sizes = [8, 32], strides = [1, 1]} : vector<8x128xf32> to vector<8x32xf32>
    %247 = vector.extract_strided_slice %243 {offsets = [0, 64], sizes = [8, 32], strides = [1, 1]} : vector<8x128xf32> to vector<8x32xf32>
    %248 = arith.mulf %245, %211 : vector<8x32xf32>
    %249 = arith.mulf %244, %247 : vector<8x32xf32>
    %250 = arith.addf %248, %249 : vector<8x32xf32>
    %251 = math.tanh %250 : vector<8x32xf32>
    %252 = arith.mulf %246, %251 : vector<8x32xf32>
    %c8_i32_62 = arith.constant 8 : i32
    %253 = arith.muli %arg1, %c8_i32_62 : i32
    %254 = arith.addi %253, %c4_i32 : i32
    %c8_i32_63 = arith.constant 8 : i32
    %255 = arith.cmpi slt, %254, %c8_i32_63 : i32
    %256 = arith.select %255, %233, %208 : vector<8x32xf32>
    %257 = arith.select %255, %231, %209 : vector<8x32xf32>
    %258 = arith.select %255, %252, %210 : vector<8x32xf32>
    %259 = arith.select %255, %250, %211 : vector<8x32xf32>
    %c5_i32 = arith.constant 5 : i32
    %c8_i32_64 = arith.constant 8 : i32
    %260 = arith.muli %c5_i32, %c8_i32_64 : i32
    %261 = tpu.assume_multiple %260, 8 : i32
    %262 = arith.index_cast %261 : i32 to index
    %c0_65 = arith.constant 0 : index
    %263 = vector.load %arg11[%262, %c0_65] : memref<64x128xf32, #tpu.memory_space<vmem>>, vector<8x128xf32>
    %264 = arith.truncf %256 : vector<8x32xf32> to vector<8x32xbf16>
    %cst_66 = arith.constant dense<0.000000e+00> : vector<8x128xf32>
    %265 = tpu.matmul %264, %11, %cst_66 {dimension_numbers = #tpu.dot_dimension_numbers<[1], [0], [0], [1], [0, 0, 1, 1], [], []>} : vector<8x32xbf16>, vector<32x128xbf16>, vector<8x128xf32> -> vector<8x128xf32>
    %266 = arith.addf %263, %265 : vector<8x128xf32>
    %267 = arith.negf %266 : vector<8x128xf32>
    %268 = math.exp %267 : vector<8x128xf32>
    %cst_67 = arith.constant 1.000000e+00 : f32
    %269 = vector.broadcast %cst_67 : f32 to vector<8x128xf32>
    %270 = arith.addf %269, %268 : vector<8x128xf32>
    %271 = arith.divf %269, %270 : vector<8x128xf32>
    %272 = math.tanh %266 : vector<8x128xf32>
    %273 = vector.extract_strided_slice %271 {offsets = [0, 0], sizes = [8, 32], strides = [1, 1]} : vector<8x128xf32> to vector<8x32xf32>
    %274 = vector.extract_strided_slice %271 {offsets = [0, 32], sizes = [8, 32], strides = [1, 1]} : vector<8x128xf32> to vector<8x32xf32>
    %275 = vector.extract_strided_slice %271 {offsets = [0, 96], sizes = [8, 32], strides = [1, 1]} : vector<8x128xf32> to vector<8x32xf32>
    %276 = vector.extract_strided_slice %272 {offsets = [0, 64], sizes = [8, 32], strides = [1, 1]} : vector<8x128xf32> to vector<8x32xf32>
    %277 = arith.mulf %274, %257 : vector<8x32xf32>
    %278 = arith.mulf %273, %276 : vector<8x32xf32>
    %279 = arith.addf %277, %278 : vector<8x32xf32>
    %280 = math.tanh %279 : vector<8x32xf32>
    %281 = arith.mulf %275, %280 : vector<8x32xf32>
    %282 = tpu.concatenate %281, %258 in 1 : vector<8x32xf32>, vector<8x32xf32> -> vector<8x64xf32>
    %283 = arith.truncf %282 : vector<8x64xf32> to vector<8x64xbf16>
    %cst_68 = arith.constant dense<0.000000e+00> : vector<8x128xf32>
    %284 = tpu.matmul %283, %12, %cst_68 {dimension_numbers = #tpu.dot_dimension_numbers<[1], [0], [0], [1], [0, 0, 1, 1], [], []>} : vector<8x64xbf16>, vector<64x128xbf16>, vector<8x128xf32> -> vector<8x128xf32>
    %285 = arith.addf %284, %15 : vector<8x128xf32>
    %286 = arith.negf %285 : vector<8x128xf32>
    %287 = math.exp %286 : vector<8x128xf32>
    %cst_69 = arith.constant 1.000000e+00 : f32
    %288 = vector.broadcast %cst_69 : f32 to vector<8x128xf32>
    %289 = arith.addf %288, %287 : vector<8x128xf32>
    %290 = arith.divf %288, %289 : vector<8x128xf32>
    %291 = math.tanh %285 : vector<8x128xf32>
    %292 = vector.extract_strided_slice %290 {offsets = [0, 0], sizes = [8, 32], strides = [1, 1]} : vector<8x128xf32> to vector<8x32xf32>
    %293 = vector.extract_strided_slice %290 {offsets = [0, 32], sizes = [8, 32], strides = [1, 1]} : vector<8x128xf32> to vector<8x32xf32>
    %294 = vector.extract_strided_slice %290 {offsets = [0, 96], sizes = [8, 32], strides = [1, 1]} : vector<8x128xf32> to vector<8x32xf32>
    %295 = vector.extract_strided_slice %291 {offsets = [0, 64], sizes = [8, 32], strides = [1, 1]} : vector<8x128xf32> to vector<8x32xf32>
    %296 = arith.mulf %293, %259 : vector<8x32xf32>
    %297 = arith.mulf %292, %295 : vector<8x32xf32>
    %298 = arith.addf %296, %297 : vector<8x32xf32>
    %299 = math.tanh %298 : vector<8x32xf32>
    %300 = arith.mulf %294, %299 : vector<8x32xf32>
    %c8_i32_70 = arith.constant 8 : i32
    %301 = arith.muli %arg1, %c8_i32_70 : i32
    %302 = arith.addi %301, %c5_i32 : i32
    %c8_i32_71 = arith.constant 8 : i32
    %303 = arith.cmpi slt, %302, %c8_i32_71 : i32
    %304 = arith.select %303, %281, %256 : vector<8x32xf32>
    %305 = arith.select %303, %279, %257 : vector<8x32xf32>
    %306 = arith.select %303, %300, %258 : vector<8x32xf32>
    %307 = arith.select %303, %298, %259 : vector<8x32xf32>
    %c6_i32 = arith.constant 6 : i32
    %c8_i32_72 = arith.constant 8 : i32
    %308 = arith.muli %c6_i32, %c8_i32_72 : i32
    %309 = tpu.assume_multiple %308, 8 : i32
    %310 = arith.index_cast %309 : i32 to index
    %c0_73 = arith.constant 0 : index
    %311 = vector.load %arg11[%310, %c0_73] : memref<64x128xf32, #tpu.memory_space<vmem>>, vector<8x128xf32>
    %312 = arith.truncf %304 : vector<8x32xf32> to vector<8x32xbf16>
    %cst_74 = arith.constant dense<0.000000e+00> : vector<8x128xf32>
    %313 = tpu.matmul %312, %11, %cst_74 {dimension_numbers = #tpu.dot_dimension_numbers<[1], [0], [0], [1], [0, 0, 1, 1], [], []>} : vector<8x32xbf16>, vector<32x128xbf16>, vector<8x128xf32> -> vector<8x128xf32>
    %314 = arith.addf %311, %313 : vector<8x128xf32>
    %315 = arith.negf %314 : vector<8x128xf32>
    %316 = math.exp %315 : vector<8x128xf32>
    %cst_75 = arith.constant 1.000000e+00 : f32
    %317 = vector.broadcast %cst_75 : f32 to vector<8x128xf32>
    %318 = arith.addf %317, %316 : vector<8x128xf32>
    %319 = arith.divf %317, %318 : vector<8x128xf32>
    %320 = math.tanh %314 : vector<8x128xf32>
    %321 = vector.extract_strided_slice %319 {offsets = [0, 0], sizes = [8, 32], strides = [1, 1]} : vector<8x128xf32> to vector<8x32xf32>
    %322 = vector.extract_strided_slice %319 {offsets = [0, 32], sizes = [8, 32], strides = [1, 1]} : vector<8x128xf32> to vector<8x32xf32>
    %323 = vector.extract_strided_slice %319 {offsets = [0, 96], sizes = [8, 32], strides = [1, 1]} : vector<8x128xf32> to vector<8x32xf32>
    %324 = vector.extract_strided_slice %320 {offsets = [0, 64], sizes = [8, 32], strides = [1, 1]} : vector<8x128xf32> to vector<8x32xf32>
    %325 = arith.mulf %322, %305 : vector<8x32xf32>
    %326 = arith.mulf %321, %324 : vector<8x32xf32>
    %327 = arith.addf %325, %326 : vector<8x32xf32>
    %328 = math.tanh %327 : vector<8x32xf32>
    %329 = arith.mulf %323, %328 : vector<8x32xf32>
    %330 = tpu.concatenate %329, %306 in 1 : vector<8x32xf32>, vector<8x32xf32> -> vector<8x64xf32>
    %331 = arith.truncf %330 : vector<8x64xf32> to vector<8x64xbf16>
    %cst_76 = arith.constant dense<0.000000e+00> : vector<8x128xf32>
    %332 = tpu.matmul %331, %12, %cst_76 {dimension_numbers = #tpu.dot_dimension_numbers<[1], [0], [0], [1], [0, 0, 1, 1], [], []>} : vector<8x64xbf16>, vector<64x128xbf16>, vector<8x128xf32> -> vector<8x128xf32>
    %333 = arith.addf %332, %15 : vector<8x128xf32>
    %334 = arith.negf %333 : vector<8x128xf32>
    %335 = math.exp %334 : vector<8x128xf32>
    %cst_77 = arith.constant 1.000000e+00 : f32
    %336 = vector.broadcast %cst_77 : f32 to vector<8x128xf32>
    %337 = arith.addf %336, %335 : vector<8x128xf32>
    %338 = arith.divf %336, %337 : vector<8x128xf32>
    %339 = math.tanh %333 : vector<8x128xf32>
    %340 = vector.extract_strided_slice %338 {offsets = [0, 0], sizes = [8, 32], strides = [1, 1]} : vector<8x128xf32> to vector<8x32xf32>
    %341 = vector.extract_strided_slice %338 {offsets = [0, 32], sizes = [8, 32], strides = [1, 1]} : vector<8x128xf32> to vector<8x32xf32>
    %342 = vector.extract_strided_slice %338 {offsets = [0, 96], sizes = [8, 32], strides = [1, 1]} : vector<8x128xf32> to vector<8x32xf32>
    %343 = vector.extract_strided_slice %339 {offsets = [0, 64], sizes = [8, 32], strides = [1, 1]} : vector<8x128xf32> to vector<8x32xf32>
    %344 = arith.mulf %341, %307 : vector<8x32xf32>
    %345 = arith.mulf %340, %343 : vector<8x32xf32>
    %346 = arith.addf %344, %345 : vector<8x32xf32>
    %347 = math.tanh %346 : vector<8x32xf32>
    %348 = arith.mulf %342, %347 : vector<8x32xf32>
    %c8_i32_78 = arith.constant 8 : i32
    %349 = arith.muli %arg1, %c8_i32_78 : i32
    %350 = arith.addi %349, %c6_i32 : i32
    %c8_i32_79 = arith.constant 8 : i32
    %351 = arith.cmpi slt, %350, %c8_i32_79 : i32
    %352 = arith.select %351, %329, %304 : vector<8x32xf32>
    %353 = arith.select %351, %327, %305 : vector<8x32xf32>
    %354 = arith.select %351, %348, %306 : vector<8x32xf32>
    %355 = arith.select %351, %346, %307 : vector<8x32xf32>
    %c7_i32 = arith.constant 7 : i32
    %c8_i32_80 = arith.constant 8 : i32
    %356 = arith.muli %c7_i32, %c8_i32_80 : i32
    %357 = tpu.assume_multiple %356, 8 : i32
    %358 = arith.index_cast %357 : i32 to index
    %c0_81 = arith.constant 0 : index
    %359 = vector.load %arg11[%358, %c0_81] : memref<64x128xf32, #tpu.memory_space<vmem>>, vector<8x128xf32>
    %360 = arith.truncf %352 : vector<8x32xf32> to vector<8x32xbf16>
    %cst_82 = arith.constant dense<0.000000e+00> : vector<8x128xf32>
    %361 = tpu.matmul %360, %11, %cst_82 {dimension_numbers = #tpu.dot_dimension_numbers<[1], [0], [0], [1], [0, 0, 1, 1], [], []>} : vector<8x32xbf16>, vector<32x128xbf16>, vector<8x128xf32> -> vector<8x128xf32>
    %362 = arith.addf %359, %361 : vector<8x128xf32>
    %363 = arith.negf %362 : vector<8x128xf32>
    %364 = math.exp %363 : vector<8x128xf32>
    %cst_83 = arith.constant 1.000000e+00 : f32
    %365 = vector.broadcast %cst_83 : f32 to vector<8x128xf32>
    %366 = arith.addf %365, %364 : vector<8x128xf32>
    %367 = arith.divf %365, %366 : vector<8x128xf32>
    %368 = math.tanh %362 : vector<8x128xf32>
    %369 = vector.extract_strided_slice %367 {offsets = [0, 0], sizes = [8, 32], strides = [1, 1]} : vector<8x128xf32> to vector<8x32xf32>
    %370 = vector.extract_strided_slice %367 {offsets = [0, 32], sizes = [8, 32], strides = [1, 1]} : vector<8x128xf32> to vector<8x32xf32>
    %371 = vector.extract_strided_slice %367 {offsets = [0, 96], sizes = [8, 32], strides = [1, 1]} : vector<8x128xf32> to vector<8x32xf32>
    %372 = vector.extract_strided_slice %368 {offsets = [0, 64], sizes = [8, 32], strides = [1, 1]} : vector<8x128xf32> to vector<8x32xf32>
    %373 = arith.mulf %370, %353 : vector<8x32xf32>
    %374 = arith.mulf %369, %372 : vector<8x32xf32>
    %375 = arith.addf %373, %374 : vector<8x32xf32>
    %376 = math.tanh %375 : vector<8x32xf32>
    %377 = arith.mulf %371, %376 : vector<8x32xf32>
    %378 = tpu.concatenate %377, %354 in 1 : vector<8x32xf32>, vector<8x32xf32> -> vector<8x64xf32>
    %379 = arith.truncf %378 : vector<8x64xf32> to vector<8x64xbf16>
    %cst_84 = arith.constant dense<0.000000e+00> : vector<8x128xf32>
    %380 = tpu.matmul %379, %12, %cst_84 {dimension_numbers = #tpu.dot_dimension_numbers<[1], [0], [0], [1], [0, 0, 1, 1], [], []>} : vector<8x64xbf16>, vector<64x128xbf16>, vector<8x128xf32> -> vector<8x128xf32>
    %381 = arith.addf %380, %15 : vector<8x128xf32>
    %382 = arith.negf %381 : vector<8x128xf32>
    %383 = math.exp %382 : vector<8x128xf32>
    %cst_85 = arith.constant 1.000000e+00 : f32
    %384 = vector.broadcast %cst_85 : f32 to vector<8x128xf32>
    %385 = arith.addf %384, %383 : vector<8x128xf32>
    %386 = arith.divf %384, %385 : vector<8x128xf32>
    %387 = math.tanh %381 : vector<8x128xf32>
    %388 = vector.extract_strided_slice %386 {offsets = [0, 0], sizes = [8, 32], strides = [1, 1]} : vector<8x128xf32> to vector<8x32xf32>
    %389 = vector.extract_strided_slice %386 {offsets = [0, 32], sizes = [8, 32], strides = [1, 1]} : vector<8x128xf32> to vector<8x32xf32>
    %390 = vector.extract_strided_slice %386 {offsets = [0, 96], sizes = [8, 32], strides = [1, 1]} : vector<8x128xf32> to vector<8x32xf32>
    %391 = vector.extract_strided_slice %387 {offsets = [0, 64], sizes = [8, 32], strides = [1, 1]} : vector<8x128xf32> to vector<8x32xf32>
    %392 = arith.mulf %389, %355 : vector<8x32xf32>
    %393 = arith.mulf %388, %391 : vector<8x32xf32>
    %394 = arith.addf %392, %393 : vector<8x32xf32>
    %395 = math.tanh %394 : vector<8x32xf32>
    %396 = arith.mulf %390, %395 : vector<8x32xf32>
    %c8_i32_86 = arith.constant 8 : i32
    %397 = arith.muli %arg1, %c8_i32_86 : i32
    %398 = arith.addi %397, %c7_i32 : i32
    %c8_i32_87 = arith.constant 8 : i32
    %399 = arith.cmpi slt, %398, %c8_i32_87 : i32
    %400 = arith.select %399, %377, %352 : vector<8x32xf32>
    %401 = arith.select %399, %375, %353 : vector<8x32xf32>
    %402 = arith.select %399, %396, %354 : vector<8x32xf32>
    %403 = arith.select %399, %394, %355 : vector<8x32xf32>
    %c8_i32_88 = arith.constant 8 : i32
    %c0_89 = arith.constant 0 : index
    %c0_90 = arith.constant 0 : index
    %404 = vector.load %arg12[%c0_89, %c0_90] : memref<8x32xf32, #tpu.memory_space<vmem>>, vector<8x32xf32>
    tpu.vector_store %arg12[%c0_89, %c0_90], %400 {strides = array<i32>} : memref<8x32xf32, #tpu.memory_space<vmem>>, vector<8x32xf32>,
    %c0_91 = arith.constant 0 : index
    %c0_92 = arith.constant 0 : index
    %405 = vector.load %arg13[%c0_91, %c0_92] : memref<8x32xf32, #tpu.memory_space<vmem>>, vector<8x32xf32>
    tpu.vector_store %arg13[%c0_91, %c0_92], %401 {strides = array<i32>} : memref<8x32xf32, #tpu.memory_space<vmem>>, vector<8x32xf32>,
    %c0_93 = arith.constant 0 : index
    %c0_94 = arith.constant 0 : index
    %406 = vector.load %arg14[%c0_93, %c0_94] : memref<8x32xf32, #tpu.memory_space<vmem>>, vector<8x32xf32>
    tpu.vector_store %arg14[%c0_93, %c0_94], %402 {strides = array<i32>} : memref<8x32xf32, #tpu.memory_space<vmem>>, vector<8x32xf32>,
    %c0_95 = arith.constant 0 : index
    %c0_96 = arith.constant 0 : index
    %407 = vector.load %arg15[%c0_95, %c0_96] : memref<8x32xf32, #tpu.memory_space<vmem>>, vector<8x32xf32>
    tpu.vector_store %arg15[%c0_95, %c0_96], %403 {strides = array<i32>} : memref<8x32xf32, #tpu.memory_space<vmem>>, vector<8x32xf32>,
    %c0_i32_97 = arith.constant 0 : i32
    %408 = arith.cmpi eq, %arg1, %c0_i32_97 : i32
    %409 = arith.extui %408 : i1 to i32
    %c0_i32_98 = arith.constant 0 : i32
    %410 = arith.cmpi ne, %409, %c0_i32_98 : i32
    scf.if %410 {
      %411 = arith.truncf %402 : vector<8x32xf32> to vector<8x32xbf16>
      %c0_99 = arith.constant 0 : index
      %c0_100 = arith.constant 0 : index
      %412 = vector.load %arg8[%c0_99, %c0_100] : memref<32x4xbf16, #tpu.memory_space<vmem>>, vector<32x4xbf16>
      %cst_101 = arith.constant dense<0.000000e+00> : vector<8x4xf32>
      %413 = tpu.matmul %411, %412, %cst_101 {dimension_numbers = #tpu.dot_dimension_numbers<[1], [0], [0], [1], [0, 0, 1, 1], [], []>} : vector<8x32xbf16>, vector<32x4xbf16>, vector<8x4xf32> -> vector<8x4xf32>
      %c0_102 = arith.constant 0 : index
      %c0_103 = arith.constant 0 : index
      %414 = vector.load %arg9[%c0_102, %c0_103] : memref<1x4xf32, #tpu.memory_space<vmem>>, vector<1x4xf32>
      %415 = vector.broadcast %414 : vector<1x4xf32> to vector<8x4xf32>
      %416 = arith.addf %413, %415 : vector<8x4xf32>
      %cst_104 = arith.constant dense<0xFF800000> : vector<8xf32>
      %417 = vector.multi_reduction <maximumf>, %416, %cst_104 [1] : vector<8x4xf32> to vector<8xf32>
      %418 = vector.shape_cast %417 : vector<8xf32> to vector<8x1xf32>
      %419 = vector.broadcast %418 : vector<8x1xf32> to vector<8x4xf32>
      %420 = arith.subf %416, %419 : vector<8x4xf32>
      %421 = math.exp %420 : vector<8x4xf32>
      %cst_105 = arith.constant dense<0.000000e+00> : vector<8xf32>
      %422 = vector.multi_reduction <add>, %421, %cst_105 [1] : vector<8x4xf32> to vector<8xf32>
      %423 = vector.shape_cast %422 : vector<8xf32> to vector<8x1xf32>
      %424 = math.log %423 : vector<8x1xf32>
      %425 = vector.broadcast %424 : vector<8x1xf32> to vector<8x4xf32>
      %426 = arith.subf %420, %425 : vector<8x4xf32>
      %c0_106 = arith.constant 0 : index
      %c0_107 = arith.constant 0 : index
      %427 = vector.load %arg10[%c0_106, %c0_107] : memref<8x4xf32, #tpu.memory_space<vmem>>, vector<8x4xf32>
      tpu.vector_store %arg10[%c0_106, %c0_107], %426 {strides = array<i32>} : memref<8x4xf32, #tpu.memory_space<vmem>>, vector<8x4xf32>,
    } else {
    }
    return
  }
  func.func @transform_0(%arg0: i32, %arg1: i32) -> (i32, i32, i32, i32) {
    %c0_i32 = arith.constant 0 : i32
    %c0_i32_0 = arith.constant 0 : i32
    %c0_i32_1 = arith.constant 0 : i32
    return %arg0, %arg1, %c0_i32, %c0_i32_0 : i32, i32, i32, i32
  }
  func.func @transform_1(%arg0: i32, %arg1: i32) -> (i32, i32) {
    %c0_i32 = arith.constant 0 : i32
    %c0_i32_0 = arith.constant 0 : i32
    %c0_i32_1 = arith.constant 0 : i32
    return %c0_i32, %c0_i32_0 : i32, i32
  }
  func.func @transform_2(%arg0: i32, %arg1: i32) -> (i32, i32) {
    %c0_i32 = arith.constant 0 : i32
    %c0_i32_0 = arith.constant 0 : i32
    %c0_i32_1 = arith.constant 0 : i32
    return %c0_i32, %c0_i32_0 : i32, i32
  }
  func.func @transform_3(%arg0: i32, %arg1: i32) -> (i32, i32) {
    %c0_i32 = arith.constant 0 : i32
    %c0_i32_0 = arith.constant 0 : i32
    %c0_i32_1 = arith.constant 0 : i32
    return %c0_i32, %c0_i32_0 : i32, i32
  }
  func.func @transform_4(%arg0: i32, %arg1: i32) -> (i32, i32) {
    %c0_i32 = arith.constant 0 : i32
    %c0_i32_0 = arith.constant 0 : i32
    %c0_i32_1 = arith.constant 0 : i32
    return %c0_i32, %c0_i32_0 : i32, i32
  }
  func.func @transform_5(%arg0: i32, %arg1: i32) -> (i32, i32) {
    %c0_i32 = arith.constant 0 : i32
    %c0_i32_0 = arith.constant 0 : i32
    %c0_i32_1 = arith.constant 0 : i32
    return %c0_i32, %c0_i32_0 : i32, i32
  }
  func.func @transform_6(%arg0: i32, %arg1: i32) -> (i32, i32) {
    %c0_i32 = arith.constant 0 : i32
    %c0_i32_0 = arith.constant 0 : i32
    %c0_i32_1 = arith.constant 0 : i32
    return %c0_i32, %c0_i32_0 : i32, i32
  }
  func.func @transform_7(%arg0: i32, %arg1: i32) -> (i32, i32) {
    %c0_i32 = arith.constant 0 : i32
    %c0_i32_0 = arith.constant 0 : i32
    %c0_i32_1 = arith.constant 0 : i32
    return %c0_i32, %c0_i32_0 : i32, i32
  }
  func.func @transform_8(%arg0: i32, %arg1: i32) -> (i32, i32) {
    %c0_i32 = arith.constant 0 : i32
    %c0_i32_0 = arith.constant 0 : i32
    return %arg0, %c0_i32 : i32, i32
  }
}

</mosaic_0001>

<llo_original>
// kernel: tpu_custom_call.1
$region0: #{tpu_custom_call.1}
  #allocation0 [shape = 'u32[]', space=smem, size = 0x4, offset = 0x4, fixed_abs, tag = 'smem constant byte address 0x4 - core index']
  #allocation1 [shape = 'u32[144,128]{1,0:T(1,128)}', space=vmem, size = 0x12000, scoped, tag = 'internal scratch']
  #allocation2 [shape = 'f32[64,128]{1,0:T(8,128)}', space=vmem, size = 0x8000, scoped, tag = 'scratch operand']
  #allocation3 [shape = 'f32[8,32]{1,0:T(8,128)}', space=vmem, size = 0x1000, scoped, tag = 'scratch operand']
  #allocation4 [shape = 'f32[8,32]{1,0:T(8,128)}', space=vmem, size = 0x1000, scoped, tag = 'scratch operand']
  #allocation5 [shape = 'f32[8,32]{1,0:T(8,128)}', space=vmem, size = 0x1000, scoped, tag = 'scratch operand']
  #allocation6 [shape = 'f32[8,32]{1,0:T(8,128)}', space=vmem, size = 0x1000, scoped, tag = 'scratch operand']
  %s0 = inlined_call_operand.vmem [shape: bf16[1,1,64,16], index: 0, kind: input, shape index: {}]
  %s1 = inlined_call_operand.vmem [shape: bf16[16,128], index: 1, kind: input, shape index: {}]
  %s2 = inlined_call_operand.vmem [shape: bf16[32,128], index: 2, kind: input, shape index: {}]
  %s3 = inlined_call_operand.vmem [shape: f32[1,128], index: 3, kind: input, shape index: {}]
  %s4 = inlined_call_operand.vmem [shape: bf16[64,128], index: 4, kind: input, shape index: {}]
  %s5 = inlined_call_operand.vmem [shape: f32[1,128], index: 5, kind: input, shape index: {}]
  %s6 = inlined_call_operand.vmem [shape: bf16[32,4], index: 6, kind: input, shape index: {}]
  %s7 = inlined_call_operand.vmem [shape: f32[1,4], index: 7, kind: input, shape index: {}]
  %s8 = inlined_call_operand.vmem [shape: f32[8,4], index: 8, kind: output, shape index: {}]
  %s9 = sld [smem:[#allocation0]]
  $region50: #{tpu_custom_call.1} parent=0
    _
  %s11 = ssub.s32 1, %s9
  %s12 = scalar_select 0, %s11, %s9
  // Predicated region
  $region2: #{tpu_custom_call.1} parent=0 // pred_check
    _
  $region3: #{tpu_custom_call.1} parent=0 // pred_check_branch
    %14 = sbr.rel (0) target = $region5
  $region4: #{tpu_custom_call.1} parent=0 // pred_region
    _
  $region5: #{tpu_custom_call.1} parent=0 // pred_fallthru
    _
  // Predicated region
  $region6: #{tpu_custom_call.1} parent=0 // pred_check
    _
  $region7: #{tpu_custom_call.1} parent=0 // pred_check_branch
    %16 = sbr.rel (0) target = $region9
  $region8: #{tpu_custom_call.1} parent=0 // pred_region
    _
  $region9: #{tpu_custom_call.1} parent=0 // pred_fallthru
    _
  // Predicated region
  $region10: #{tpu_custom_call.1} parent=0 // pred_check
    _
  $region11: #{tpu_custom_call.1} parent=0 // pred_check_branch
    %18 = sbr.rel (0) target = $region13
  $region12: #{tpu_custom_call.1} parent=0 // pred_region
    _
  $region13: #{tpu_custom_call.1} parent=0 // pred_fallthru
    _
  // Predicated region
  $region14: #{tpu_custom_call.1} parent=0 // pred_check
    _
  $region15: #{tpu_custom_call.1} parent=0 // pred_check_branch
    %20 = sbr.rel (0) target = $region17
  $region16: #{tpu_custom_call.1} parent=0 // pred_region
    _
  $region17: #{tpu_custom_call.1} parent=0 // pred_fallthru
    _
  // Predicated region
  $region18: #{tpu_custom_call.1} parent=0 // pred_check
    _
  $region19: #{tpu_custom_call.1} parent=0 // pred_check_branch
    %22 = sbr.rel (0) target = $region21
  $region20: #{tpu_custom_call.1} parent=0 // pred_region
    _
  $region21: #{tpu_custom_call.1} parent=0 // pred_fallthru
    _
  // Predicated region
  $region22: #{tpu_custom_call.1} parent=0 // pred_check
    _
  $region23: #{tpu_custom_call.1} parent=0 // pred_check_branch
    %24 = sbr.rel (0) target = $region25
  $region24: #{tpu_custom_call.1} parent=0 // pred_region
    _
  $region25: #{tpu_custom_call.1} parent=0 // pred_fallthru
    _
  // Predicated region
  $region26: #{tpu_custom_call.1} parent=0 // pred_check
    _
  $region27: #{tpu_custom_call.1} parent=0 // pred_check_branch
    %26 = sbr.rel (0) target = $region29
  $region28: #{tpu_custom_call.1} parent=0 // pred_region
    _
  $region29: #{tpu_custom_call.1} parent=0 // pred_fallthru
    _
  // Predicated region
  $region30: #{tpu_custom_call.1} parent=0 // pred_check
    _
  $region31: #{tpu_custom_call.1} parent=0 // pred_check_branch
    %28 = sbr.rel (0) target = $region33
  $region32: #{tpu_custom_call.1} parent=0 // pred_region
    _
  $region33: #{tpu_custom_call.1} parent=0 // pred_fallthru
    _
  %p30 = scmp.eq.s32.totalorder 0, 0
  // Predicated region
  $region34: #{tpu_custom_call.1} parent=0 // pred_check
    %p31 = pneg %p30
  $region35: #{tpu_custom_call.1} parent=0 // pred_check_branch
    %33 = sbr.rel (%p31) target = $region37
  $region36: #{tpu_custom_call.1} parent=0 // pred_region
    %vm34 = vcmask 261120
    %35 = vst.msk [vmem:[#allocation3] sm:$0xff] %vm34, 0.0
    %36 = vst.msk [vmem:[#allocation4] sm:$0xff] %vm34, 0.0
    %37 = vst.msk [vmem:[#allocation5] sm:$0xff] %vm34, 0.0
    %38 = vst.msk [vmem:[#allocation6] sm:$0xff] %vm34, 0.0
  $region37: #{tpu_custom_call.1} parent=0 // pred_fallthru
    _
  %v39 = vld [vmem:[%s0] sm:$0xf]
  %v40 = vld [vmem:[%s0 + $0x4] sm:$0xf]
  %v41 = vld [vmem:[%s0 + $0x8] sm:$0xf]
  %v42 = vld [vmem:[%s0 + $0xc] sm:$0xf]
  %v43 = vld [vmem:[%s0 + $0x10] sm:$0xf]
  %v44 = vld [vmem:[%s0 + $0x14] sm:$0xf]
  %v45 = vld [vmem:[%s0 + $0x18] sm:$0xf]
  %v46 = vld [vmem:[%s0 + $0x1c] sm:$0xf]
  %v47 = vld [vmem:[%s1] sm:$0xf]
  %v48 = vld [vmem:[%s1 + $0x4] sm:$0xf]
  %v49 = vld [vmem:[%s3] sm:$0x1]
  %v51 = vlaneseq
  %v52 = vshrl.u32 %v51, 7
  %v53 = vsub.s32 0, %v52
  %v54 = vrot.slane %v49, %v53
  %v64 = vunpack.c.l.b16 %v39
  %v65 = vunpack.c.l.b16 %v40
  %v66 = vunpack.c.l.b16 %v41
  %v67 = vunpack.c.l.b16 %v42
  %v68 = vunpack.c.l.b16 %v43
  %v69 = vunpack.c.l.b16 %v44
  %v70 = vunpack.c.l.b16 %v45
  %v71 = vunpack.c.l.b16 %v46
  %v72 = vpack.c.b16 %v65, %v64
  %v73 = vpack.c.b16 %v67, %v66
  %v74 = vpack.c.b16 %v69, %v68
  %v75 = vpack.c.b16 %v71, %v70
  %v78 = vunpack.c.l.b16 %v47
  %v79 = vunpack.c.l.b16 %v48
  %v80 = vpack.c.b16 %v79, %v78
  %vm82 = vcmask 130048
  %v84 = vsel %vm82, %v72, 0
  %v87 = vsel %vm82, %v73, 0
  %v90 = vsel %vm82, %v74, 0
  %v93 = vsel %vm82, %v75, 0
  %95 = vmatprep.subr.bf16.mxu0 0
  %96 = vmatpush1.bf16.msra.mxu0 %v80
  %97 = vmatprep.subr.bf16.mxu0 0
  %98 = vmatpush1.bf16.msra.mxu0 0
  %99 = vmatprep.subr.bf16.mxu0 0
  %100 = vmatpush1.bf16.msra.mxu0 0
  %101 = vmatprep.subr.bf16.mxu0 0
  %102 = vmatpush1.bf16.msra.mxu0 0
  %103 = vmatprep.subr.bf16.mxu0 0
  %104 = vmatpush1.bf16.msra.mxu0 0
  %105 = vmatprep.subr.bf16.mxu0 0
  %106 = vmatpush1.bf16.msra.mxu0 0
  %107 = vmatprep.subr.bf16.mxu0 0
  %108 = vmatpush1.bf16.msra.mxu0 0
  %109 = vmatprep.subr.bf16.mxu0 0
  %110 = vmatpush1.bf16.msra.mxu0 0
  %111 = vmatprep.subr.bf16.mxu0 0
  %112 = vmatpush1.bf16.msra.mxu0 0
  %113 = vmatprep.subr.bf16.mxu0 0
  %114 = vmatpush1.bf16.msra.mxu0 0
  %115 = vmatprep.subr.bf16.mxu0 0
  %116 = vmatpush1.bf16.msra.mxu0 0
  %117 = vmatprep.subr.bf16.mxu0 0
  %118 = vmatpush1.bf16.msra.mxu0 0
  %119 = vmatprep.subr.bf16.mxu0 0
  %120 = vmatpush1.bf16.msra.mxu0 0
  %121 = vmatprep.subr.bf16.mxu0 0
  %122 = vmatpush1.bf16.msra.mxu0 0
  %123 = vmatprep.subr.bf16.mxu0 0
  %124 = vmatpush1.bf16.msra.mxu0 0
  %125 = vmatprep.subr.bf16.mxu0 0
  %126 = vmatpush1.bf16.msra.mxu0 0
  %127 = vmatprep.mubr.bf16.mxu0 0
  %128 = vmatmul.mubr.bf16.gmra.mrb[0].mxu0 %v84
  %v129 = vpop.f32.mrb[0].mxu0
  %v130 = vadd.f32 %v54, %v129
  %v131 = vpop.f32.mrb[0].mxu0
  %v132 = vpop.f32.mrb[0].mxu0
  %v133 = vadd.f32 %v54, %v132
  %v134 = vpop.f32.mrb[0].mxu0
  %135 = vmatprep.mubr.bf16.mxu0 0
  %136 = vmatmul.mubr.bf16.gmra.mrb[0].mxu0 %v87
  %v137 = vpop.f32.mrb[0].mxu0
  %v138 = vadd.f32 %v54, %v137
  %v139 = vpop.f32.mrb[0].mxu0
  %v140 = vpop.f32.mrb[0].mxu0
  %v141 = vadd.f32 %v54, %v140
  %v142 = vpop.f32.mrb[0].mxu0
  %143 = vmatprep.mubr.bf16.mxu0 0
  %144 = vmatmul.mubr.bf16.gmra.mrb[0].mxu0 %v90
  %v145 = vpop.f32.mrb[0].mxu0
  %v146 = vadd.f32 %v54, %v145
  %v147 = vpop.f32.mrb[0].mxu0
  %v148 = vpop.f32.mrb[0].mxu0
  %v149 = vadd.f32 %v54, %v148
  %v150 = vpop.f32.mrb[0].mxu0
  %151 = vmatprep.mubr.bf16.mxu0 0
  %152 = vmatmul.mubr.bf16.gmra.mrb[0].mxu0 %v93
  %v153 = vpop.f32.mrb[0].mxu0
  %v154 = vadd.f32 %v54, %v153
  %v155 = vpop.f32.mrb[0].mxu0
  %v156 = vpop.f32.mrb[0].mxu0
  %v157 = vadd.f32 %v54, %v156
  %v158 = vpop.f32.mrb[0].mxu0
  %159 = vdwg.mxu0
  %160 = vst [vmem:[#allocation2] sm:$0xff] %v130
  %161 = vst [vmem:[#allocation2 + $0x8] sm:$0xff] %v133
  %162 = vst [vmem:[#allocation2 + $0x10] sm:$0xff] %v138
  %163 = vst [vmem:[#allocation2 + $0x18] sm:$0xff] %v141
  %164 = vst [vmem:[#allocation2 + $0x20] sm:$0xff] %v146
  %165 = vst [vmem:[#allocation2 + $0x28] sm:$0xff] %v149
  %166 = vst [vmem:[#allocation2 + $0x30] sm:$0xff] %v154
  %167 = vst [vmem:[#allocation2 + $0x38] sm:$0xff] %v157
  %v168 = vld [vmem:[%s2] sm:$0xf]
  %v169 = vld [vmem:[%s2 + $0x4] sm:$0xf]
  %v170 = vld [vmem:[%s2 + $0x8] sm:$0xf]
  %v171 = vld [vmem:[%s2 + $0xc] sm:$0xf]
  %v172 = vld [vmem:[%s4] sm:$0xf]
  %v173 = vld [vmem:[%s4 + $0x4] sm:$0xf]
  %v174 = vld [vmem:[%s4 + $0x8] sm:$0xf]
  %v175 = vld [vmem:[%s4 + $0xc] sm:$0xf]
  %v176 = vld [vmem:[%s4 + $0x10] sm:$0xf]
  %v177 = vld [vmem:[%s4 + $0x14] sm:$0xf]
  %v178 = vld [vmem:[%s4 + $0x18] sm:$0xf]
  %v179 = vld [vmem:[%s4 + $0x1c] sm:$0xf]
  %v180 = vld [vmem:[%s5] sm:$0x1]
  %v182 = vlaneseq
  %v183 = vshrl.u32 %v182, 7
  %v184 = vsub.s32 0, %v183
  %v185 = vrot.slane %v180, %v184
  %v187 = vld [vmem:[#allocation3] sm:$0xff]
  %v188 = vld [vmem:[#allocation4] sm:$0xff]
  %v189 = vld [vmem:[#allocation5] sm:$0xff]
  %v190 = vld [vmem:[#allocation6] sm:$0xff]
  %v191 = vld [vmem:[#allocation2] sm:$0xff]
  %v192 = vpack.c.bf16 %v187, %v187
  %v197 = vunpack.c.l.b16 %v168
  %v198 = vunpack.c.l.b16 %v169
  %v199 = vunpack.c.l.b16 %v170
  %v200 = vunpack.c.l.b16 %v171
  %v201 = vpack.c.b16 %v198, %v197
  %v202 = vpack.c.b16 %v200, %v199
  %vm205 = vcmask 261120
  %v207 = vsel %vm205, %v192, 0
  %209 = vmatprep.subr.bf16.mxu0 0
  %210 = vmatpush1.bf16.msra.mxu0 %v201
  %211 = vmatprep.subr.bf16.mxu0 0
  %212 = vmatpush1.bf16.msra.mxu0 %v202
  %213 = vmatprep.subr.bf16.mxu0 0
  %214 = vmatpush1.bf16.msra.mxu0 0
  %215 = vmatprep.subr.bf16.mxu0 0
  %216 = vmatpush1.bf16.msra.mxu0 0
  %217 = vmatprep.subr.bf16.mxu0 0
  %218 = vmatpush1.bf16.msra.mxu0 0
  %219 = vmatprep.subr.bf16.mxu0 0
  %220 = vmatpush1.bf16.msra.mxu0 0
  %221 = vmatprep.subr.bf16.mxu0 0
  %222 = vmatpush1.bf16.msra.mxu0 0
  %223 = vmatprep.subr.bf16.mxu0 0
  %224 = vmatpush1.bf16.msra.mxu0 0
  %225 = vmatprep.subr.bf16.mxu0 0
  %226 = vmatpush1.bf16.msra.mxu0 0
  %227 = vmatprep.subr.bf16.mxu0 0
  %228 = vmatpush1.bf16.msra.mxu0 0
  %229 = vmatprep.subr.bf16.mxu0 0
  %230 = vmatpush1.bf16.msra.mxu0 0
  %231 = vmatprep.subr.bf16.mxu0 0
  %232 = vmatpush1.bf16.msra.mxu0 0
  %233 = vmatprep.subr.bf16.mxu0 0
  %234 = vmatpush1.bf16.msra.mxu0 0
  %235 = vmatprep.subr.bf16.mxu0 0
  %236 = vmatpush1.bf16.msra.mxu0 0
  %237 = vmatprep.subr.bf16.mxu0 0
  %238 = vmatpush1.bf16.msra.mxu0 0
  %239 = vmatprep.subr.bf16.mxu0 0
  %240 = vmatpush1.bf16.msra.mxu0 0
  %241 = vmatprep.mubr.bf16.mxu0 0
  %242 = vmatmul.mubr.bf16.gmra.mrb[0].mxu0 %v207
  %v243 = vpop.f32.mrb[0].mxu0
  %v244 = vadd.f32 0.0, %v243
  %v245 = vpop.f32.mrb[0].mxu0
  %v246 = vpop.f32.mrb[0].mxu0
  %v247 = vpop.f32.mrb[0].mxu0
  %248 = vdwg.mxu0
  %v249 = vadd.f32 %v191, %v244
  %v250 = vxor.u32 %v249, 2147483648
  %v251 = vmul.f32 %v250, 1.442695
  %v252 = vpow.pop %v251
  %v253 = vadd.f32 %v252, 1.0
  %v254 = vrcp.pop %v253
  %v255 = vmul.f32 1.0, %v254
  %v256 = vtanh.pop %v249
  %258 = vrot.lane.b32.xlu0 %v188, 32
  %v259 = vpop.permute.xlu0 %258
  %v261 = vmul.f32 %v255, %v259
  %263 = vrot.lane.b32.xlu0 %v256, 64
  %v264 = vpop.permute.xlu0 %263
  %v266 = vmul.f32 %v255, %v264
  %268 = vrot.lane.b32.xlu0 %v266, 32
  %v269 = vpop.permute.xlu0 %268
  %v271 = vadd.f32 %v261, %v269
  %v272 = vtanh.pop %v271
  %274 = vrot.lane.b32.xlu0 %v272, 64
  %v275 = vpop.permute.xlu0 %274
  %v277 = vmul.f32 %v255, %v275
  %279 = vrot.lane.b32.xlu0 %v277, 32
  %v280 = vpop.permute.xlu0 %279
  %283 = vrot.lane.b32.xlu0 %v189, 32
  %v284 = vpop.permute.xlu0 %283
  %v286 = vsel %vm205, %v280, %v284
  %v287 = vpack.c.bf16 %v286, %v286
  %v296 = vunpack.c.l.b16 %v172
  %v297 = vunpack.c.l.b16 %v173
  %v298 = vunpack.c.l.b16 %v174
  %v299 = vunpack.c.l.b16 %v175
  %v300 = vunpack.c.l.b16 %v176
  %v301 = vunpack.c.l.b16 %v177
  %v302 = vunpack.c.l.b16 %v178
  %v303 = vunpack.c.l.b16 %v179
  %v304 = vpack.c.b16 %v297, %v296
  %v305 = vpack.c.b16 %v299, %v298
  %v306 = vpack.c.b16 %v301, %v300
  %v307 = vpack.c.b16 %v303, %v302
  %vm312 = vcmask 523264
  %v314 = vsel %vm312, %v287, 0
  %316 = vmatprep.subr.bf16.mxu0 0
  %317 = vmatpush1.bf16.msra.mxu0 %v304
  %318 = vmatprep.subr.bf16.mxu0 0
  %319 = vmatpush1.bf16.msra.mxu0 %v305
  %320 = vmatprep.subr.bf16.mxu0 0
  %321 = vmatpush1.bf16.msra.mxu0 %v306
  %322 = vmatprep.subr.bf16.mxu0 0
  %323 = vmatpush1.bf16.msra.mxu0 %v307
  %324 = vmatprep.subr.bf16.mxu0 0
  %325 = vmatpush1.bf16.msra.mxu0 0
  %326 = vmatprep.subr.bf16.mxu0 0
  %327 = vmatpush1.bf16.msra.mxu0 0
  %328 = vmatprep.subr.bf16.mxu0 0
  %329 = vmatpush1.bf16.msra.mxu0 0
  %330 = vmatprep.subr.bf16.mxu0 0
  %331 = vmatpush1.bf16.msra.mxu0 0
  %332 = vmatprep.subr.bf16.mxu0 0
  %333 = vmatpush1.bf16.msra.mxu0 0
  %334 = vmatprep.subr.bf16.mxu0 0
  %335 = vmatpush1.bf16.msra.mxu0 0
  %336 = vmatprep.subr.bf16.mxu0 0
  %337 = vmatpush1.bf16.msra.mxu0 0
  %338 = vmatprep.subr.bf16.mxu0 0
  %339 = vmatpush1.bf16.msra.mxu0 0
  %340 = vmatprep.subr.bf16.mxu0 0
  %341 = vmatpush1.bf16.msra.mxu0 0
  %342 = vmatprep.subr.bf16.mxu0 0
  %343 = vmatpush1.bf16.msra.mxu0 0
  %344 = vmatprep.subr.bf16.mxu0 0
  %345 = vmatpush1.bf16.msra.mxu0 0
  %346 = vmatprep.subr.bf16.mxu0 0
  %347 = vmatpush1.bf16.msra.mxu0 0
  %348 = vmatprep.mubr.bf16.mxu0 0
  %349 = vmatmul.mubr.bf16.gmra.mrb[0].mxu0 %v314
  %v350 = vpop.f32.mrb[0].mxu0
  %v351 = vadd.f32 %v185, %v350
  %v352 = vpop.f32.mrb[0].mxu0
  %v353 = vpop.f32.mrb[0].mxu0
  %v354 = vpop.f32.mrb[0].mxu0
  %355 = vdwg.mxu0
  %v356 = vxor.u32 %v351, 2147483648
  %v357 = vmul.f32 %v356, 1.442695
  %v358 = vpow.pop %v357
  %v359 = vadd.f32 %v358, 1.0
  %v360 = vrcp.pop %v359
  %v361 = vmul.f32 1.0, %v360
  %v362 = vtanh.pop %v351
  %364 = vrot.lane.b32.xlu0 %v190, 32
  %v365 = vpop.permute.xlu0 %364
  %v367 = vmul.f32 %v361, %v365
  %369 = vrot.lane.b32.xlu0 %v362, 64
  %v370 = vpop.permute.xlu0 %369
  %v372 = vmul.f32 %v361, %v370
  %374 = vrot.lane.b32.xlu0 %v372, 32
  %v375 = vpop.permute.xlu0 %374
  %v377 = vadd.f32 %v367, %v375
  %v378 = vtanh.pop %v377
  %380 = vrot.lane.b32.xlu0 %v378, 64
  %v381 = vpop.permute.xlu0 %380
  %v383 = vmul.f32 %v361, %v381
  %s384 = smul.u32 0, 8
  %p385 = scmp.lt.s32.totalorder %s384, 8
  %s386 = scalar_select %p385, 1, 0
  %v387 = vstv %s386
  %vm388 = vcmp.eq.s32.totalorder %v387, 1
  %390 = vrot.lane.b32.xlu0 %v187, 96
  %v391 = vpop.permute.xlu0 %390
  %v393 = vsel %vm388, %v277, %v391
  %v394 = vsel %vm388, %v271, %v259
  %395 = vrot.lane.b32.xlu0 %v189, 96
  %v396 = vpop.permute.xlu0 %395
  %v398 = vsel %vm388, %v383, %v396
  %v399 = vsel %vm388, %v377, %v365
  %s400 = scalar_lea.vmem [#allocation2], 8
  %v401 = vld [vmem:[%s400] sm:$0xff]
  %v402 = vpack.c.bf16 %v393, %v393
  %404 = vrot.lane.b32.xlu0 %v402, 32
  %v405 = vpop.permute.xlu0 %404
  %v407 = vsel %vm205, %v405, 0
  %409 = vmatprep.subr.bf16.mxu0 0
  %410 = vmatpush1.bf16.msra.mxu0 %v201
  %411 = vmatprep.subr.bf16.mxu0 0
  %412 = vmatpush1.bf16.msra.mxu0 %v202
  %413 = vmatprep.subr.bf16.mxu0 0
  %414 = vmatpush1.bf16.msra.mxu0 0
  %415 = vmatprep.subr.bf16.mxu0 0
  %416 = vmatpush1.bf16.msra.mxu0 0
  %417 = vmatprep.subr.bf16.mxu0 0
  %418 = vmatpush1.bf16.msra.mxu0 0
  %419 = vmatprep.subr.bf16.mxu0 0
  %420 = vmatpush1.bf16.msra.mxu0 0
  %421 = vmatprep.subr.bf16.mxu0 0
  %422 = vmatpush1.bf16.msra.mxu0 0
  %423 = vmatprep.subr.bf16.mxu0 0
  %424 = vmatpush1.bf16.msra.mxu0 0
  %425 = vmatprep.subr.bf16.mxu0 0
  %426 = vmatpush1.bf16.msra.mxu0 0
  %427 = vmatprep.subr.bf16.mxu0 0
  %428 = vmatpush1.bf16.msra.mxu0 0
  %429 = vmatprep.subr.bf16.mxu0 0
  %430 = vmatpush1.bf16.msra.mxu0 0
  %431 = vmatprep.subr.bf16.mxu0 0
  %432 = vmatpush1.bf16.msra.mxu0 0
  %433 = vmatprep.subr.bf16.mxu0 0
  %434 = vmatpush1.bf16.msra.mxu0 0
  %435 = vmatprep.subr.bf16.mxu0 0
  %436 = vmatpush1.bf16.msra.mxu0 0
  %437 = vmatprep.subr.bf16.mxu0 0
  %438 = vmatpush1.bf16.msra.mxu0 0
  %439 = vmatprep.subr.bf16.mxu0 0
  %440 = vmatpush1.bf16.msra.mxu0 0
  %441 = vmatprep.mubr.bf16.mxu0 0
  %442 = vmatmul.mubr.bf16.gmra.mrb[0].mxu0 %v407
  %v443 = vpop.f32.mrb[0].mxu0
  %v444 = vadd.f32 0.0, %v443
  %v445 = vpop.f32.mrb[0].mxu0
  %v446 = vpop.f32.mrb[0].mxu0
  %v447 = vpop.f32.mrb[0].mxu0
  %448 = vdwg.mxu0
  %v449 = vadd.f32 %v401, %v444
  %v450 = vxor.u32 %v449, 2147483648
  %v451 = vmul.f32 %v450, 1.442695
  %v452 = vpow.pop %v451
  %v453 = vadd.f32 %v452, 1.0
  %v454 = vrcp.pop %v453
  %v455 = vmul.f32 1.0, %v454
  %v456 = vtanh.pop %v449
  %v457 = vmul.f32 %v455, %v394
  %459 = vrot.lane.b32.xlu0 %v456, 64
  %v460 = vpop.permute.xlu0 %459
  %v462 = vmul.f32 %v455, %v460
  %464 = vrot.lane.b32.xlu0 %v462, 32
  %v465 = vpop.permute.xlu0 %464
  %v467 = vadd.f32 %v457, %v465
  %v468 = vtanh.pop %v467
  %470 = vrot.lane.b32.xlu0 %v468, 64
  %v471 = vpop.permute.xlu0 %470
  %v473 = vmul.f32 %v455, %v471
  %475 = vrot.lane.b32.xlu0 %v473, 32
  %v476 = vpop.permute.xlu0 %475
  %479 = vrot.lane.b32.xlu0 %v398, 64
  %v480 = vpop.permute.xlu0 %479
  %v482 = vsel %vm205, %v476, %v480
  %v483 = vpack.c.bf16 %v482, %v482
  %v485 = vsel %vm312, %v483, 0
  %487 = vmatprep.subr.bf16.mxu0 0
  %488 = vmatpush1.bf16.msra.mxu0 %v304
  %489 = vmatprep.subr.bf16.mxu0 0
  %490 = vmatpush1.bf16.msra.mxu0 %v305
  %491 = vmatprep.subr.bf16.mxu0 0
  %492 = vmatpush1.bf16.msra.mxu0 %v306
  %493 = vmatprep.subr.bf16.mxu0 0
  %494 = vmatpush1.bf16.msra.mxu0 %v307
  %495 = vmatprep.subr.bf16.mxu0 0
  %496 = vmatpush1.bf16.msra.mxu0 0
  %497 = vmatprep.subr.bf16.mxu0 0
  %498 = vmatpush1.bf16.msra.mxu0 0
  %499 = vmatprep.subr.bf16.mxu0 0
  %500 = vmatpush1.bf16.msra.mxu0 0
  %501 = vmatprep.subr.bf16.mxu0 0
  %502 = vmatpush1.bf16.msra.mxu0 0
  %503 = vmatprep.subr.bf16.mxu0 0
  %504 = vmatpush1.bf16.msra.mxu0 0
  %505 = vmatprep.subr.bf16.mxu0 0
  %506 = vmatpush1.bf16.msra.mxu0 0
  %507 = vmatprep.subr.bf16.mxu0 0
  %508 = vmatpush1.bf16.msra.mxu0 0
  %509 = vmatprep.subr.bf16.mxu0 0
  %510 = vmatpush1.bf16.msra.mxu0 0
  %511 = vmatprep.subr.bf16.mxu0 0
  %512 = vmatpush1.bf16.msra.mxu0 0
  %513 = vmatprep.subr.bf16.mxu0 0
  %514 = vmatpush1.bf16.msra.mxu0 0
  %515 = vmatprep.subr.bf16.mxu0 0
  %516 = vmatpush1.bf16.msra.mxu0 0
  %517 = vmatprep.subr.bf16.mxu0 0
  %518 = vmatpush1.bf16.msra.mxu0 0
  %519 = vmatprep.mubr.bf16.mxu0 0
  %520 = vmatmul.mubr.bf16.gmra.mrb[0].mxu0 %v485
  %v521 = vpop.f32.mrb[0].mxu0
  %v522 = vadd.f32 %v185, %v521
  %v523 = vpop.f32.mrb[0].mxu0
  %v524 = vpop.f32.mrb[0].mxu0
  %v525 = vpop.f32.mrb[0].mxu0
  %526 = vdwg.mxu0
  %v527 = vxor.u32 %v522, 2147483648
  %v528 = vmul.f32 %v527, 1.442695
  %v529 = vpow.pop %v528
  %v530 = vadd.f32 %v529, 1.0
  %v531 = vrcp.pop %v530
  %v532 = vmul.f32 1.0, %v531
  %v533 = vtanh.pop %v522
  %v534 = vmul.f32 %v532, %v399
  %536 = vrot.lane.b32.xlu0 %v533, 64
  %v537 = vpop.permute.xlu0 %536
  %v539 = vmul.f32 %v532, %v537
  %541 = vrot.lane.b32.xlu0 %v539, 32
  %v542 = vpop.permute.xlu0 %541
  %v544 = vadd.f32 %v534, %v542
  %v545 = vtanh.pop %v544
  %547 = vrot.lane.b32.xlu0 %v545, 64
  %v548 = vpop.permute.xlu0 %547
  %v550 = vmul.f32 %v532, %v548
  %s551 = sadd.s32 %s384, 1
  %p552 = scmp.lt.s32.totalorder %s551, 8
  %s553 = scalar_select %p552, 1, 0
  %v554 = vstv %s553
  %vm555 = vcmp.eq.s32.totalorder %v554, 1
  %v556 = vsel %vm555, %v473, %v393
  %v557 = vsel %vm555, %v467, %v394
  %v558 = vsel %vm555, %v550, %v398
  %v559 = vsel %vm555, %v544, %v399
  %s560 = scalar_lea.vmem [#allocation2], 16
  %v561 = vld [vmem:[%s560] sm:$0xff]
  %v562 = vpack.c.bf16 %v556, %v556
  %564 = vrot.lane.b32.xlu0 %v562, 32
  %v565 = vpop.permute.xlu0 %564
  %v567 = vsel %vm205, %v565, 0
  %569 = vmatprep.subr.bf16.mxu0 0
  %570 = vmatpush1.bf16.msra.mxu0 %v201
  %571 = vmatprep.subr.bf16.mxu0 0
  %572 = vmatpush1.bf16.msra.mxu0 %v202
  %573 = vmatprep.subr.bf16.mxu0 0
  %574 = vmatpush1.bf16.msra.mxu0 0
  %575 = vmatprep.subr.bf16.mxu0 0
  %576 = vmatpush1.bf16.msra.mxu0 0
  %577 = vmatprep.subr.bf16.mxu0 0
  %578 = vmatpush1.bf16.msra.mxu0 0
  %579 = vmatprep.subr.bf16.mxu0 0
  %580 = vmatpush1.bf16.msra.mxu0 0
  %581 = vmatprep.subr.bf16.mxu0 0
  %582 = vmatpush1.bf16.msra.mxu0 0
  %583 = vmatprep.subr.bf16.mxu0 0
  %584 = vmatpush1.bf16.msra.mxu0 0
  %585 = vmatprep.subr.bf16.mxu0 0
  %586 = vmatpush1.bf16.msra.mxu0 0
  %587 = vmatprep.subr.bf16.mxu0 0
  %588 = vmatpush1.bf16.msra.mxu0 0
  %589 = vmatprep.subr.bf16.mxu0 0
  %590 = vmatpush1.bf16.msra.mxu0 0
  %591 = vmatprep.subr.bf16.mxu0 0
  %592 = vmatpush1.bf16.msra.mxu0 0
  %593 = vmatprep.subr.bf16.mxu0 0
  %594 = vmatpush1.bf16.msra.mxu0 0
  %595 = vmatprep.subr.bf16.mxu0 0
  %596 = vmatpush1.bf16.msra.mxu0 0
  %597 = vmatprep.subr.bf16.mxu0 0
  %598 = vmatpush1.bf16.msra.mxu0 0
  %599 = vmatprep.subr.bf16.mxu0 0
  %600 = vmatpush1.bf16.msra.mxu0 0
  %601 = vmatprep.mubr.bf16.mxu0 0
  %602 = vmatmul.mubr.bf16.gmra.mrb[0].mxu0 %v567
  %v603 = vpop.f32.mrb[0].mxu0
  %v604 = vadd.f32 0.0, %v603
  %v605 = vpop.f32.mrb[0].mxu0
  %v606 = vpop.f32.mrb[0].mxu0
  %v607 = vpop.f32.mrb[0].mxu0
  %608 = vdwg.mxu0
  %v609 = vadd.f32 %v561, %v604
  %v610 = vxor.u32 %v609, 2147483648
  %v611 = vmul.f32 %v610, 1.442695
  %v612 = vpow.pop %v611
  %v613 = vadd.f32 %v612, 1.0
  %v614 = vrcp.pop %v613
  %v615 = vmul.f32 1.0, %v614
  %v616 = vtanh.pop %v609
  %v617 = vmul.f32 %v615, %v557
  %619 = vrot.lane.b32.xlu0 %v616, 64
  %v620 = vpop.permute.xlu0 %619
  %v622 = vmul.f32 %v615, %v620
  %624 = vrot.lane.b32.xlu0 %v622, 32
  %v625 = vpop.permute.xlu0 %624
  %v627 = vadd.f32 %v617, %v625
  %v628 = vtanh.pop %v627
  %630 = vrot.lane.b32.xlu0 %v628, 64
  %v631 = vpop.permute.xlu0 %630
  %v633 = vmul.f32 %v615, %v631
  %635 = vrot.lane.b32.xlu0 %v633, 32
  %v636 = vpop.permute.xlu0 %635
  %639 = vrot.lane.b32.xlu0 %v558, 64
  %v640 = vpop.permute.xlu0 %639
  %v642 = vsel %vm205, %v636, %v640
  %v643 = vpack.c.bf16 %v642, %v642
  %v645 = vsel %vm312, %v643, 0
  %647 = vmatprep.subr.bf16.mxu0 0
  %648 = vmatpush1.bf16.msra.mxu0 %v304
  %649 = vmatprep.subr.bf16.mxu0 0
  %650 = vmatpush1.bf16.msra.mxu0 %v305
  %651 = vmatprep.subr.bf16.mxu0 0
  %652 = vmatpush1.bf16.msra.mxu0 %v306
  %653 = vmatprep.subr.bf16.mxu0 0
  %654 = vmatpush1.bf16.msra.mxu0 %v307
  %655 = vmatprep.subr.bf16.mxu0 0
  %656 = vmatpush1.bf16.msra.mxu0 0
  %657 = vmatprep.subr.bf16.mxu0 0
  %658 = vmatpush1.bf16.msra.mxu0 0
  %659 = vmatprep.subr.bf16.mxu0 0
  %660 = vmatpush1.bf16.msra.mxu0 0
  %661 = vmatprep.subr.bf16.mxu0 0
  %662 = vmatpush1.bf16.msra.mxu0 0
  %663 = vmatprep.subr.bf16.mxu0 0
  %664 = vmatpush1.bf16.msra.mxu0 0
  %665 = vmatprep.subr.bf16.mxu0 0
  %666 = vmatpush1.bf16.msra.mxu0 0
  %667 = vmatprep.subr.bf16.mxu0 0
  %668 = vmatpush1.bf16.msra.mxu0 0
  %669 = vmatprep.subr.bf16.mxu0 0
  %670 = vmatpush1.bf16.msra.mxu0 0
  %671 = vmatprep.subr.bf16.mxu0 0
  %672 = vmatpush1.bf16.msra.mxu0 0
  %673 = vmatprep.subr.bf16.mxu0 0
  %674 = vmatpush1.bf16.msra.mxu0 0
  %675 = vmatprep.subr.bf16.mxu0 0
  %676 = vmatpush1.bf16.msra.mxu0 0
  %677 = vmatprep.subr.bf16.mxu0 0
  %678 = vmatpush1.bf16.msra.mxu0 0
  %679 = vmatprep.mubr.bf16.mxu0 0
  %680 = vmatmul.mubr.bf16.gmra.mrb[0].mxu0 %v645
  %v681 = vpop.f32.mrb[0].mxu0
  %v682 = vadd.f32 %v185, %v681
  %v683 = vpop.f32.mrb[0].mxu0
  %v684 = vpop.f32.mrb[0].mxu0
  %v685 = vpop.f32.mrb[0].mxu0
  %686 = vdwg.mxu0
  %v687 = vxor.u32 %v682, 2147483648
  %v688 = vmul.f32 %v687, 1.442695
  %v689 = vpow.pop %v688
  %v690 = vadd.f32 %v689, 1.0
  %v691 = vrcp.pop %v690
  %v692 = vmul.f32 1.0, %v691
  %v693 = vtanh.pop %v682
  %v694 = vmul.f32 %v692, %v559
  %696 = vrot.lane.b32.xlu0 %v693, 64
  %v697 = vpop.permute.xlu0 %696
  %v699 = vmul.f32 %v692, %v697
  %701 = vrot.lane.b32.xlu0 %v699, 32
  %v702 = vpop.permute.xlu0 %701
  %v704 = vadd.f32 %v694, %v702
  %v705 = vtanh.pop %v704
  %707 = vrot.lane.b32.xlu0 %v705, 64
  %v708 = vpop.permute.xlu0 %707
  %v710 = vmul.f32 %v692, %v708
  %s711 = sadd.s32 %s384, 2
  %p712 = scmp.lt.s32.totalorder %s711, 8
  %s713 = scalar_select %p712, 1, 0
  %v714 = vstv %s713
  %vm715 = vcmp.eq.s32.totalorder %v714, 1
  %v716 = vsel %vm715, %v633, %v556
  %v717 = vsel %vm715, %v627, %v557
  %v718 = vsel %vm715, %v710, %v558
  %v719 = vsel %vm715, %v704, %v559
  %s720 = scalar_lea.vmem [#allocation2], 24
  %v721 = vld [vmem:[%s720] sm:$0xff]
  %v722 = vpack.c.bf16 %v716, %v716
  %724 = vrot.lane.b32.xlu0 %v722, 32
  %v725 = vpop.permute.xlu0 %724
  %v727 = vsel %vm205, %v725, 0
  %729 = vmatprep.subr.bf16.mxu0 0
  %730 = vmatpush1.bf16.msra.mxu0 %v201
  %731 = vmatprep.subr.bf16.mxu0 0
  %732 = vmatpush1.bf16.msra.mxu0 %v202
  %733 = vmatprep.subr.bf16.mxu0 0
  %734 = vmatpush1.bf16.msra.mxu0 0
  %735 = vmatprep.subr.bf16.mxu0 0
  %736 = vmatpush1.bf16.msra.mxu0 0
  %737 = vmatprep.subr.bf16.mxu0 0
  %738 = vmatpush1.bf16.msra.mxu0 0
  %739 = vmatprep.subr.bf16.mxu0 0
  %740 = vmatpush1.bf16.msra.mxu0 0
  %741 = vmatprep.subr.bf16.mxu0 0
  %742 = vmatpush1.bf16.msra.mxu0 0
  %743 = vmatprep.subr.bf16.mxu0 0
  %744 = vmatpush1.bf16.msra.mxu0 0
  %745 = vmatprep.subr.bf16.mxu0 0
  %746 = vmatpush1.bf16.msra.mxu0 0
  %747 = vmatprep.subr.bf16.mxu0 0
  %748 = vmatpush1.bf16.msra.mxu0 0
  %749 = vmatprep.subr.bf16.mxu0 0
  %750 = vmatpush1.bf16.msra.mxu0 0
  %751 = vmatprep.subr.bf16.mxu0 0
  %752 = vmatpush1.bf16.msra.mxu0 0
  %753 = vmatprep.subr.bf16.mxu0 0
  %754 = vmatpush1.bf16.msra.mxu0 0
  %755 = vmatprep.subr.bf16.mxu0 0
  %756 = vmatpush1.bf16.msra.mxu0 0
  %757 = vmatprep.subr.bf16.mxu0 0
  %758 = vmatpush1.bf16.msra.mxu0 0
  %759 = vmatprep.subr.bf16.mxu0 0
  %760 = vmatpush1.bf16.msra.mxu0 0
  %761 = vmatprep.mubr.bf16.mxu0 0
  %762 = vmatmul.mubr.bf16.gmra.mrb[0].mxu0 %v727
  %v763 = vpop.f32.mrb[0].mxu0
  %v764 = vadd.f32 0.0, %v763
  %v765 = vpop.f32.mrb[0].mxu0
  %v766 = vpop.f32.mrb[0].mxu0
  %v767 = vpop.f32.mrb[0].mxu0
  %768 = vdwg.mxu0
  %v769 = vadd.f32 %v721, %v764
  %v770 = vxor.u32 %v769, 2147483648
  %v771 = vmul.f32 %v770, 1.442695
  %v772 = vpow.pop %v771
  %v773 = vadd.f32 %v772, 1.0
  %v774 = vrcp.pop %v773
  %v775 = vmul.f32 1.0, %v774
  %v776 = vtanh.pop %v769
  %v777 = vmul.f32 %v775, %v717
  %779 = vrot.lane.b32.xlu0 %v776, 64
  %v780 = vpop.permute.xlu0 %779
  %v782 = vmul.f32 %v775, %v780
  %784 = vrot.lane.b32.xlu0 %v782, 32
  %v785 = vpop.permute.xlu0 %784
  %v787 = vadd.f32 %v777, %v785
  %v788 = vtanh.pop %v787
  %790 = vrot.lane.b32.xlu0 %v788, 64
  %v791 = vpop.permute.xlu0 %790
  %v793 = vmul.f32 %v775, %v791
  %795 = vrot.lane.b32.xlu0 %v793, 32
  %v796 = vpop.permute.xlu0 %795
  %799 = vrot.lane.b32.xlu0 %v718, 64
  %v800 = vpop.permute.xlu0 %799
  %v802 = vsel %vm205, %v796, %v800
  %v803 = vpack.c.bf16 %v802, %v802
  %v805 = vsel %vm312, %v803, 0
  %807 = vmatprep.subr.bf16.mxu0 0
  %808 = vmatpush1.bf16.msra.mxu0 %v304
  %809 = vmatprep.subr.bf16.mxu0 0
  %810 = vmatpush1.bf16.msra.mxu0 %v305
  %811 = vmatprep.subr.bf16.mxu0 0
  %812 = vmatpush1.bf16.msra.mxu0 %v306
  %813 = vmatprep.subr.bf16.mxu0 0
  %814 = vmatpush1.bf16.msra.mxu0 %v307
  %815 = vmatprep.subr.bf16.mxu0 0
  %816 = vmatpush1.bf16.msra.mxu0 0
  %817 = vmatprep.subr.bf16.mxu0 0
  %818 = vmatpush1.bf16.msra.mxu0 0
  %819 = vmatprep.subr.bf16.mxu0 0
  %820 = vmatpush1.bf16.msra.mxu0 0
  %821 = vmatprep.subr.bf16.mxu0 0
  %822 = vmatpush1.bf16.msra.mxu0 0
  %823 = vmatprep.subr.bf16.mxu0 0
  %824 = vmatpush1.bf16.msra.mxu0 0
  %825 = vmatprep.subr.bf16.mxu0 0
  %826 = vmatpush1.bf16.msra.mxu0 0
  %827 = vmatprep.subr.bf16.mxu0 0
  %828 = vmatpush1.bf16.msra.mxu0 0
  %829 = vmatprep.subr.bf16.mxu0 0
  %830 = vmatpush1.bf16.msra.mxu0 0
  %831 = vmatprep.subr.bf16.mxu0 0
  %832 = vmatpush1.bf16.msra.mxu0 0
  %833 = vmatprep.subr.bf16.mxu0 0
  %834 = vmatpush1.bf16.msra.mxu0 0
  %835 = vmatprep.subr.bf16.mxu0 0
  %836 = vmatpush1.bf16.msra.mxu0 0
  %837 = vmatprep.subr.bf16.mxu0 0
  %838 = vmatpush1.bf16.msra.mxu0 0
  %839 = vmatprep.mubr.bf16.mxu0 0
  %840 = vmatmul.mubr.bf16.gmra.mrb[0].mxu0 %v805
  %v841 = vpop.f32.mrb[0].mxu0
  %v842 = vadd.f32 %v185, %v841
  %v843 = vpop.f32.mrb[0].mxu0
  %v844 = vpop.f32.mrb[0].mxu0
  %v845 = vpop.f32.mrb[0].mxu0
  %846 = vdwg.mxu0
  %v847 = vxor.u32 %v842, 2147483648
  %v848 = vmul.f32 %v847, 1.442695
  %v849 = vpow.pop %v848
  %v850 = vadd.f32 %v849, 1.0
  %v851 = vrcp.pop %v850
  %v852 = vmul.f32 1.0, %v851
  %v853 = vtanh.pop %v842
  %v854 = vmul.f32 %v852, %v719
  %856 = vrot.lane.b32.xlu0 %v853, 64
  %v857 = vpop.permute.xlu0 %856
  %v859 = vmul.f32 %v852, %v857
  %861 = vrot.lane.b32.xlu0 %v859, 32
  %v862 = vpop.permute.xlu0 %861
  %v864 = vadd.f32 %v854, %v862
  %v865 = vtanh.pop %v864
  %867 = vrot.lane.b32.xlu0 %v865, 64
  %v868 = vpop.permute.xlu0 %867
  %v870 = vmul.f32 %v852, %v868
  %s871 = sadd.s32 %s384, 3
  %p872 = scmp.lt.s32.totalorder %s871, 8
  %s873 = scalar_select %p872, 1, 0
  %v874 = vstv %s873
  %vm875 = vcmp.eq.s32.totalorder %v874, 1
  %v876 = vsel %vm875, %v793, %v716
  %v877 = vsel %vm875, %v787, %v717
  %v878 = vsel %vm875, %v870, %v718
  %v879 = vsel %vm875, %v864, %v719
  %s880 = scalar_lea.vmem [#allocation2], 32
  %v881 = vld [vmem:[%s880] sm:$0xff]
  %v882 = vpack.c.bf16 %v876, %v876
  %884 = vrot.lane.b32.xlu0 %v882, 32
  %v885 = vpop.permute.xlu0 %884
  %v887 = vsel %vm205, %v885, 0
  %889 = vmatprep.subr.bf16.mxu0 0
  %890 = vmatpush1.bf16.msra.mxu0 %v201
  %891 = vmatprep.subr.bf16.mxu0 0
  %892 = vmatpush1.bf16.msra.mxu0 %v202
  %893 = vmatprep.subr.bf16.mxu0 0
  %894 = vmatpush1.bf16.msra.mxu0 0
  %895 = vmatprep.subr.bf16.mxu0 0
  %896 = vmatpush1.bf16.msra.mxu0 0
  %897 = vmatprep.subr.bf16.mxu0 0
  %898 = vmatpush1.bf16.msra.mxu0 0
  %899 = vmatprep.subr.bf16.mxu0 0
  %900 = vmatpush1.bf16.msra.mxu0 0
  %901 = vmatprep.subr.bf16.mxu0 0
  %902 = vmatpush1.bf16.msra.mxu0 0
  %903 = vmatprep.subr.bf16.mxu0 0
  %904 = vmatpush1.bf16.msra.mxu0 0
  %905 = vmatprep.subr.bf16.mxu0 0
  %906 = vmatpush1.bf16.msra.mxu0 0
  %907 = vmatprep.subr.bf16.mxu0 0
  %908 = vmatpush1.bf16.msra.mxu0 0
  %909 = vmatprep.subr.bf16.mxu0 0
  %910 = vmatpush1.bf16.msra.mxu0 0
  %911 = vmatprep.subr.bf16.mxu0 0
  %912 = vmatpush1.bf16.msra.mxu0 0
  %913 = vmatprep.subr.bf16.mxu0 0
  %914 = vmatpush1.bf16.msra.mxu0 0
  %915 = vmatprep.subr.bf16.mxu0 0
  %916 = vmatpush1.bf16.msra.mxu0 0
  %917 = vmatprep.subr.bf16.mxu0 0
  %918 = vmatpush1.bf16.msra.mxu0 0
  %919 = vmatprep.subr.bf16.mxu0 0
  %920 = vmatpush1.bf16.msra.mxu0 0
  %921 = vmatprep.mubr.bf16.mxu0 0
  %922 = vmatmul.mubr.bf16.gmra.mrb[0].mxu0 %v887
  %v923 = vpop.f32.mrb[0].mxu0
  %v924 = vadd.f32 0.0, %v923
  %v925 = vpop.f32.mrb[0].mxu0
  %v926 = vpop.f32.mrb[0].mxu0
  %v927 = vpop.f32.mrb[0].mxu0
  %928 = vdwg.mxu0
  %v929 = vadd.f32 %v881, %v924
  %v930 = vxor.u32 %v929, 2147483648
  %v931 = vmul.f32 %v930, 1.442695
  %v932 = vpow.pop %v931
  %v933 = vadd.f32 %v932, 1.0
  %v934 = vrcp.pop %v933
  %v935 = vmul.f32 1.0, %v934
  %v936 = vtanh.pop %v929
  %v937 = vmul.f32 %v935, %v877
  %939 = vrot.lane.b32.xlu0 %v936, 64
  %v940 = vpop.permute.xlu0 %939
  %v942 = vmul.f32 %v935, %v940
  %944 = vrot.lane.b32.xlu0 %v942, 32
  %v945 = vpop.permute.xlu0 %944
  %v947 = vadd.f32 %v937, %v945
  %v948 = vtanh.pop %v947
  %950 = vrot.lane.b32.xlu0 %v948, 64
  %v951 = vpop.permute.xlu0 %950
  %v953 = vmul.f32 %v935, %v951
  %955 = vrot.lane.b32.xlu0 %v953, 32
  %v956 = vpop.permute.xlu0 %955
  %959 = vrot.lane.b32.xlu0 %v878, 64
  %v960 = vpop.permute.xlu0 %959
  %v962 = vsel %vm205, %v956, %v960
  %v963 = vpack.c.bf16 %v962, %v962
  %v965 = vsel %vm312, %v963, 0
  %967 = vmatprep.subr.bf16.mxu0 0
  %968 = vmatpush1.bf16.msra.mxu0 %v304
  %969 = vmatprep.subr.bf16.mxu0 0
  %970 = vmatpush1.bf16.msra.mxu0 %v305
  %971 = vmatprep.subr.bf16.mxu0 0
  %972 = vmatpush1.bf16.msra.mxu0 %v306
  %973 = vmatprep.subr.bf16.mxu0 0
  %974 = vmatpush1.bf16.msra.mxu0 %v307
  %975 = vmatprep.subr.bf16.mxu0 0
  %976 = vmatpush1.bf16.msra.mxu0 0
  %977 = vmatprep.subr.bf16.mxu0 0
  %978 = vmatpush1.bf16.msra.mxu0 0
  %979 = vmatprep.subr.bf16.mxu0 0
  %980 = vmatpush1.bf16.msra.mxu0 0
  %981 = vmatprep.subr.bf16.mxu0 0
  %982 = vmatpush1.bf16.msra.mxu0 0
  %983 = vmatprep.subr.bf16.mxu0 0
  %984 = vmatpush1.bf16.msra.mxu0 0
  %985 = vmatprep.subr.bf16.mxu0 0
  %986 = vmatpush1.bf16.msra.mxu0 0
  %987 = vmatprep.subr.bf16.mxu0 0
  %988 = vmatpush1.bf16.msra.mxu0 0
  %989 = vmatprep.subr.bf16.mxu0 0
  %990 = vmatpush1.bf16.msra.mxu0 0
  %991 = vmatprep.subr.bf16.mxu0 0
  %992 = vmatpush1.bf16.msra.mxu0 0
  %993 = vmatprep.subr.bf16.mxu0 0
  %994 = vmatpush1.bf16.msra.mxu0 0
  %995 = vmatprep.subr.bf16.mxu0 0
  %996 = vmatpush1.bf16.msra.mxu0 0
  %997 = vmatprep.subr.bf16.mxu0 0
  %998 = vmatpush1.bf16.msra.mxu0 0
  %999 = vmatprep.mubr.bf16.mxu0 0
  %1000 = vmatmul.mubr.bf16.gmra.mrb[0].mxu0 %v965
  %v1001 = vpop.f32.mrb[0].mxu0
  %v1002 = vadd.f32 %v185, %v1001
  %v1003 = vpop.f32.mrb[0].mxu0
  %v1004 = vpop.f32.mrb[0].mxu0
  %v1005 = vpop.f32.mrb[0].mxu0
  %1006 = vdwg.mxu0
  %v1007 = vxor.u32 %v1002, 2147483648
  %v1008 = vmul.f32 %v1007, 1.442695
  %v1009 = vpow.pop %v1008
  %v1010 = vadd.f32 %v1009, 1.0
  %v1011 = vrcp.pop %v1010
  %v1012 = vmul.f32 1.0, %v1011
  %v1013 = vtanh.pop %v1002
  %v1014 = vmul.f32 %v1012, %v879
  %1016 = vrot.lane.b32.xlu0 %v1013, 64
  %v1017 = vpop.permute.xlu0 %1016
  %v1019 = vmul.f32 %v1012, %v1017
  %1021 = vrot.lane.b32.xlu0 %v1019, 32
  %v1022 = vpop.permute.xlu0 %1021
  %v1024 = vadd.f32 %v1014, %v1022
  %v1025 = vtanh.pop %v1024
  %1027 = vrot.lane.b32.xlu0 %v1025, 64
  %v1028 = vpop.permute.xlu0 %1027
  %v1030 = vmul.f32 %v1012, %v1028
  %s1031 = sadd.s32 %s384, 4
  %p1032 = scmp.lt.s32.totalorder %s1031, 8
  %s1033 = scalar_select %p1032, 1, 0
  %v1034 = vstv %s1033
  %vm1035 = vcmp.eq.s32.totalorder %v1034, 1
  %v1036 = vsel %vm1035, %v953, %v876
  %v1037 = vsel %vm1035, %v947, %v877
  %v1038 = vsel %vm1035, %v1030, %v878
  %v1039 = vsel %vm1035, %v1024, %v879
  %s1040 = scalar_lea.vmem [#allocation2], 40
  %v1041 = vld [vmem:[%s1040] sm:$0xff]
  %v1042 = vpack.c.bf16 %v1036, %v1036
  %1044 = vrot.lane.b32.xlu0 %v1042, 32
  %v1045 = vpop.permute.xlu0 %1044
  %v1047 = vsel %vm205, %v1045, 0
  %1049 = vmatprep.subr.bf16.mxu0 0
  %1050 = vmatpush1.bf16.msra.mxu0 %v201
  %1051 = vmatprep.subr.bf16.mxu0 0
  %1052 = vmatpush1.bf16.msra.mxu0 %v202
  %1053 = vmatprep.subr.bf16.mxu0 0
  %1054 = vmatpush1.bf16.msra.mxu0 0
  %1055 = vmatprep.subr.bf16.mxu0 0
  %1056 = vmatpush1.bf16.msra.mxu0 0
  %1057 = vmatprep.subr.bf16.mxu0 0
  %1058 = vmatpush1.bf16.msra.mxu0 0
  %1059 = vmatprep.subr.bf16.mxu0 0
  %1060 = vmatpush1.bf16.msra.mxu0 0
  %1061 = vmatprep.subr.bf16.mxu0 0
  %1062 = vmatpush1.bf16.msra.mxu0 0
  %1063 = vmatprep.subr.bf16.mxu0 0
  %1064 = vmatpush1.bf16.msra.mxu0 0
  %1065 = vmatprep.subr.bf16.mxu0 0
  %1066 = vmatpush1.bf16.msra.mxu0 0
  %1067 = vmatprep.subr.bf16.mxu0 0
  %1068 = vmatpush1.bf16.msra.mxu0 0
  %1069 = vmatprep.subr.bf16.mxu0 0
  %1070 = vmatpush1.bf16.msra.mxu0 0
  %1071 = vmatprep.subr.bf16.mxu0 0
  %1072 = vmatpush1.bf16.msra.mxu0 0
  %1073 = vmatprep.subr.bf16.mxu0 0
  %1074 = vmatpush1.bf16.msra.mxu0 0
  %1075 = vmatprep.subr.bf16.mxu0 0
  %1076 = vmatpush1.bf16.msra.mxu0 0
  %1077 = vmatprep.subr.bf16.mxu0 0
  %1078 = vmatpush1.bf16.msra.mxu0 0
  %1079 = vmatprep.subr.bf16.mxu0 0
  %1080 = vmatpush1.bf16.msra.mxu0 0
  %1081 = vmatprep.mubr.bf16.mxu0 0
  %1082 = vmatmul.mubr.bf16.gmra.mrb[0].mxu0 %v1047
  %v1083 = vpop.f32.mrb[0].mxu0
  %v1084 = vadd.f32 0.0, %v1083
  %v1085 = vpop.f32.mrb[0].mxu0
  %v1086 = vpop.f32.mrb[0].mxu0
  %v1087 = vpop.f32.mrb[0].mxu0
  %1088 = vdwg.mxu0
  %v1089 = vadd.f32 %v1041, %v1084
  %v1090 = vxor.u32 %v1089, 2147483648
  %v1091 = vmul.f32 %v1090, 1.442695
  %v1092 = vpow.pop %v1091
  %v1093 = vadd.f32 %v1092, 1.0
  %v1094 = vrcp.pop %v1093
  %v1095 = vmul.f32 1.0, %v1094
  %v1096 = vtanh.pop %v1089
  %v1097 = vmul.f32 %v1095, %v1037
  %1099 = vrot.lane.b32.xlu0 %v1096, 64
  %v1100 = vpop.permute.xlu0 %1099
  %v1102 = vmul.f32 %v1095, %v1100
  %1104 = vrot.lane.b32.xlu0 %v1102, 32
  %v1105 = vpop.permute.xlu0 %1104
  %v1107 = vadd.f32 %v1097, %v1105
  %v1108 = vtanh.pop %v1107
  %1110 = vrot.lane.b32.xlu0 %v1108, 64
  %v1111 = vpop.permute.xlu0 %1110
  %v1113 = vmul.f32 %v1095, %v1111
  %1115 = vrot.lane.b32.xlu0 %v1113, 32
  %v1116 = vpop.permute.xlu0 %1115
  %1119 = vrot.lane.b32.xlu0 %v1038, 64
  %v1120 = vpop.permute.xlu0 %1119
  %v1122 = vsel %vm205, %v1116, %v1120
  %v1123 = vpack.c.bf16 %v1122, %v1122
  %v1125 = vsel %vm312, %v1123, 0
  %1127 = vmatprep.subr.bf16.mxu0 0
  %1128 = vmatpush1.bf16.msra.mxu0 %v304
  %1129 = vmatprep.subr.bf16.mxu0 0
  %1130 = vmatpush1.bf16.msra.mxu0 %v305
  %1131 = vmatprep.subr.bf16.mxu0 0
  %1132 = vmatpush1.bf16.msra.mxu0 %v306
  %1133 = vmatprep.subr.bf16.mxu0 0
  %1134 = vmatpush1.bf16.msra.mxu0 %v307
  %1135 = vmatprep.subr.bf16.mxu0 0
  %1136 = vmatpush1.bf16.msra.mxu0 0
  %1137 = vmatprep.subr.bf16.mxu0 0
  %1138 = vmatpush1.bf16.msra.mxu0 0
  %1139 = vmatprep.subr.bf16.mxu0 0
  %1140 = vmatpush1.bf16.msra.mxu0 0
  %1141 = vmatprep.subr.bf16.mxu0 0
  %1142 = vmatpush1.bf16.msra.mxu0 0
  %1143 = vmatprep.subr.bf16.mxu0 0
  %1144 = vmatpush1.bf16.msra.mxu0 0
  %1145 = vmatprep.subr.bf16.mxu0 0
  %1146 = vmatpush1.bf16.msra.mxu0 0
  %1147 = vmatprep.subr.bf16.mxu0 0
  %1148 = vmatpush1.bf16.msra.mxu0 0
  %1149 = vmatprep.subr.bf16.mxu0 0
  %1150 = vmatpush1.bf16.msra.mxu0 0
  %1151 = vmatprep.subr.bf16.mxu0 0
  %1152 = vmatpush1.bf16.msra.mxu0 0
  %1153 = vmatprep.subr.bf16.mxu0 0
  %1154 = vmatpush1.bf16.msra.mxu0 0
  %1155 = vmatprep.subr.bf16.mxu0 0
  %1156 = vmatpush1.bf16.msra.mxu0 0
  %1157 = vmatprep.subr.bf16.mxu0 0
  %1158 = vmatpush1.bf16.msra.mxu0 0
  %1159 = vmatprep.mubr.bf16.mxu0 0
  %1160 = vmatmul.mubr.bf16.gmra.mrb[0].mxu0 %v1125
  %v1161 = vpop.f32.mrb[0].mxu0
  %v1162 = vadd.f32 %v185, %v1161
  %v1163 = vpop.f32.mrb[0].mxu0
  %v1164 = vpop.f32.mrb[0].mxu0
  %v1165 = vpop.f32.mrb[0].mxu0
  %1166 = vdwg.mxu0
  %v1167 = vxor.u32 %v1162, 2147483648
  %v1168 = vmul.f32 %v1167, 1.442695
  %v1169 = vpow.pop %v1168
  %v1170 = vadd.f32 %v1169, 1.0
  %v1171 = vrcp.pop %v1170
  %v1172 = vmul.f32 1.0, %v1171
  %v1173 = vtanh.pop %v1162
  %v1174 = vmul.f32 %v1172, %v1039
  %1176 = vrot.lane.b32.xlu0 %v1173, 64
  %v1177 = vpop.permute.xlu0 %1176
  %v1179 = vmul.f32 %v1172, %v1177
  %1181 = vrot.lane.b32.xlu0 %v1179, 32
  %v1182 = vpop.permute.xlu0 %1181
  %v1184 = vadd.f32 %v1174, %v1182
  %v1185 = vtanh.pop %v1184
  %1187 = vrot.lane.b32.xlu0 %v1185, 64
  %v1188 = vpop.permute.xlu0 %1187
  %v1190 = vmul.f32 %v1172, %v1188
  %s1191 = sadd.s32 %s384, 5
  %p1192 = scmp.lt.s32.totalorder %s1191, 8
  %s1193 = scalar_select %p1192, 1, 0
  %v1194 = vstv %s1193
  %vm1195 = vcmp.eq.s32.totalorder %v1194, 1
  %v1196 = vsel %vm1195, %v1113, %v1036
  %v1197 = vsel %vm1195, %v1107, %v1037
  %v1198 = vsel %vm1195, %v1190, %v1038
  %v1199 = vsel %vm1195, %v1184, %v1039
  %s1200 = scalar_lea.vmem [#allocation2], 48
  %v1201 = vld [vmem:[%s1200] sm:$0xff]
  %v1202 = vpack.c.bf16 %v1196, %v1196
  %1204 = vrot.lane.b32.xlu0 %v1202, 32
  %v1205 = vpop.permute.xlu0 %1204
  %v1207 = vsel %vm205, %v1205, 0
  %1209 = vmatprep.subr.bf16.mxu0 0
  %1210 = vmatpush1.bf16.msra.mxu0 %v201
  %1211 = vmatprep.subr.bf16.mxu0 0
  %1212 = vmatpush1.bf16.msra.mxu0 %v202
  %1213 = vmatprep.subr.bf16.mxu0 0
  %1214 = vmatpush1.bf16.msra.mxu0 0
  %1215 = vmatprep.subr.bf16.mxu0 0
  %1216 = vmatpush1.bf16.msra.mxu0 0
  %1217 = vmatprep.subr.bf16.mxu0 0
  %1218 = vmatpush1.bf16.msra.mxu0 0
  %1219 = vmatprep.subr.bf16.mxu0 0
  %1220 = vmatpush1.bf16.msra.mxu0 0
  %1221 = vmatprep.subr.bf16.mxu0 0
  %1222 = vmatpush1.bf16.msra.mxu0 0
  %1223 = vmatprep.subr.bf16.mxu0 0
  %1224 = vmatpush1.bf16.msra.mxu0 0
  %1225 = vmatprep.subr.bf16.mxu0 0
  %1226 = vmatpush1.bf16.msra.mxu0 0
  %1227 = vmatprep.subr.bf16.mxu0 0
  %1228 = vmatpush1.bf16.msra.mxu0 0
  %1229 = vmatprep.subr.bf16.mxu0 0
  %1230 = vmatpush1.bf16.msra.mxu0 0
  %1231 = vmatprep.subr.bf16.mxu0 0
  %1232 = vmatpush1.bf16.msra.mxu0 0
  %1233 = vmatprep.subr.bf16.mxu0 0
  %1234 = vmatpush1.bf16.msra.mxu0 0
  %1235 = vmatprep.subr.bf16.mxu0 0
  %1236 = vmatpush1.bf16.msra.mxu0 0
  %1237 = vmatprep.subr.bf16.mxu0 0
  %1238 = vmatpush1.bf16.msra.mxu0 0
  %1239 = vmatprep.subr.bf16.mxu0 0
  %1240 = vmatpush1.bf16.msra.mxu0 0
  %1241 = vmatprep.mubr.bf16.mxu0 0
  %1242 = vmatmul.mubr.bf16.gmra.mrb[0].mxu0 %v1207
  %v1243 = vpop.f32.mrb[0].mxu0
  %v1244 = vadd.f32 0.0, %v1243
  %v1245 = vpop.f32.mrb[0].mxu0
  %v1246 = vpop.f32.mrb[0].mxu0
  %v1247 = vpop.f32.mrb[0].mxu0
  %1248 = vdwg.mxu0
  %v1249 = vadd.f32 %v1201, %v1244
  %v1250 = vxor.u32 %v1249, 2147483648
  %v1251 = vmul.f32 %v1250, 1.442695
  %v1252 = vpow.pop %v1251
  %v1253 = vadd.f32 %v1252, 1.0
  %v1254 = vrcp.pop %v1253
  %v1255 = vmul.f32 1.0, %v1254
  %v1256 = vtanh.pop %v1249
  %v1257 = vmul.f32 %v1255, %v1197
  %1259 = vrot.lane.b32.xlu0 %v1256, 64
  %v1260 = vpop.permute.xlu0 %1259
  %v1262 = vmul.f32 %v1255, %v1260
  %1264 = vrot.lane.b32.xlu0 %v1262, 32
  %v1265 = vpop.permute.xlu0 %1264
  %v1267 = vadd.f32 %v1257, %v1265
  %v1268 = vtanh.pop %v1267
  %1270 = vrot.lane.b32.xlu0 %v1268, 64
  %v1271 = vpop.permute.xlu0 %1270
  %v1273 = vmul.f32 %v1255, %v1271
  %1275 = vrot.lane.b32.xlu0 %v1273, 32
  %v1276 = vpop.permute.xlu0 %1275
  %1279 = vrot.lane.b32.xlu0 %v1198, 64
  %v1280 = vpop.permute.xlu0 %1279
  %v1282 = vsel %vm205, %v1276, %v1280
  %v1283 = vpack.c.bf16 %v1282, %v1282
  %v1285 = vsel %vm312, %v1283, 0
  %1287 = vmatprep.subr.bf16.mxu0 0
  %1288 = vmatpush1.bf16.msra.mxu0 %v304
  %1289 = vmatprep.subr.bf16.mxu0 0
  %1290 = vmatpush1.bf16.msra.mxu0 %v305
  %1291 = vmatprep.subr.bf16.mxu0 0
  %1292 = vmatpush1.bf16.msra.mxu0 %v306
  %1293 = vmatprep.subr.bf16.mxu0 0
  %1294 = vmatpush1.bf16.msra.mxu0 %v307
  %1295 = vmatprep.subr.bf16.mxu0 0
  %1296 = vmatpush1.bf16.msra.mxu0 0
  %1297 = vmatprep.subr.bf16.mxu0 0
  %1298 = vmatpush1.bf16.msra.mxu0 0
  %1299 = vmatprep.subr.bf16.mxu0 0
  %1300 = vmatpush1.bf16.msra.mxu0 0
  %1301 = vmatprep.subr.bf16.mxu0 0
  %1302 = vmatpush1.bf16.msra.mxu0 0
  %1303 = vmatprep.subr.bf16.mxu0 0
  %1304 = vmatpush1.bf16.msra.mxu0 0
  %1305 = vmatprep.subr.bf16.mxu0 0
  %1306 = vmatpush1.bf16.msra.mxu0 0
  %1307 = vmatprep.subr.bf16.mxu0 0
  %1308 = vmatpush1.bf16.msra.mxu0 0
  %1309 = vmatprep.subr.bf16.mxu0 0
  %1310 = vmatpush1.bf16.msra.mxu0 0
  %1311 = vmatprep.subr.bf16.mxu0 0
  %1312 = vmatpush1.bf16.msra.mxu0 0
  %1313 = vmatprep.subr.bf16.mxu0 0
  %1314 = vmatpush1.bf16.msra.mxu0 0
  %1315 = vmatprep.subr.bf16.mxu0 0
  %1316 = vmatpush1.bf16.msra.mxu0 0
  %1317 = vmatprep.subr.bf16.mxu0 0
  %1318 = vmatpush1.bf16.msra.mxu0 0
  %1319 = vmatprep.mubr.bf16.mxu0 0
  %1320 = vmatmul.mubr.bf16.gmra.mrb[0].mxu0 %v1285
  %v1321 = vpop.f32.mrb[0].mxu0
  %v1322 = vadd.f32 %v185, %v1321
  %v1323 = vpop.f32.mrb[0].mxu0
  %v1324 = vpop.f32.mrb[0].mxu0
  %v1325 = vpop.f32.mrb[0].mxu0
  %1326 = vdwg.mxu0
  %v1327 = vxor.u32 %v1322, 2147483648
  %v1328 = vmul.f32 %v1327, 1.442695
  %v1329 = vpow.pop %v1328
  %v1330 = vadd.f32 %v1329, 1.0
  %v1331 = vrcp.pop %v1330
  %v1332 = vmul.f32 1.0, %v1331
  %v1333 = vtanh.pop %v1322
  %v1334 = vmul.f32 %v1332, %v1199
  %1336 = vrot.lane.b32.xlu0 %v1333, 64
  %v1337 = vpop.permute.xlu0 %1336
  %v1339 = vmul.f32 %v1332, %v1337
  %1341 = vrot.lane.b32.xlu0 %v1339, 32
  %v1342 = vpop.permute.xlu0 %1341
  %v1344 = vadd.f32 %v1334, %v1342
  %v1345 = vtanh.pop %v1344
  %1347 = vrot.lane.b32.xlu0 %v1345, 64
  %v1348 = vpop.permute.xlu0 %1347
  %v1350 = vmul.f32 %v1332, %v1348
  %s1351 = sadd.s32 %s384, 6
  %p1352 = scmp.lt.s32.totalorder %s1351, 8
  %s1353 = scalar_select %p1352, 1, 0
  %v1354 = vstv %s1353
  %vm1355 = vcmp.eq.s32.totalorder %v1354, 1
  %v1356 = vsel %vm1355, %v1273, %v1196
  %v1357 = vsel %vm1355, %v1267, %v1197
  %v1358 = vsel %vm1355, %v1350, %v1198
  %v1359 = vsel %vm1355, %v1344, %v1199
  %s1360 = scalar_lea.vmem [#allocation2], 56
  %v1361 = vld [vmem:[%s1360] sm:$0xff]
  %v1362 = vpack.c.bf16 %v1356, %v1356
  %1364 = vrot.lane.b32.xlu0 %v1362, 32
  %v1365 = vpop.permute.xlu0 %1364
  %v1367 = vsel %vm205, %v1365, 0
  %1369 = vmatprep.subr.bf16.mxu0 0
  %1370 = vmatpush1.bf16.msra.mxu0 %v201
  %1371 = vmatprep.subr.bf16.mxu0 0
  %1372 = vmatpush1.bf16.msra.mxu0 %v202
  %1373 = vmatprep.subr.bf16.mxu0 0
  %1374 = vmatpush1.bf16.msra.mxu0 0
  %1375 = vmatprep.subr.bf16.mxu0 0
  %1376 = vmatpush1.bf16.msra.mxu0 0
  %1377 = vmatprep.subr.bf16.mxu0 0
  %1378 = vmatpush1.bf16.msra.mxu0 0
  %1379 = vmatprep.subr.bf16.mxu0 0
  %1380 = vmatpush1.bf16.msra.mxu0 0
  %1381 = vmatprep.subr.bf16.mxu0 0
  %1382 = vmatpush1.bf16.msra.mxu0 0
  %1383 = vmatprep.subr.bf16.mxu0 0
  %1384 = vmatpush1.bf16.msra.mxu0 0
  %1385 = vmatprep.subr.bf16.mxu0 0
  %1386 = vmatpush1.bf16.msra.mxu0 0
  %1387 = vmatprep.subr.bf16.mxu0 0
  %1388 = vmatpush1.bf16.msra.mxu0 0
  %1389 = vmatprep.subr.bf16.mxu0 0
  %1390 = vmatpush1.bf16.msra.mxu0 0
  %1391 = vmatprep.subr.bf16.mxu0 0
  %1392 = vmatpush1.bf16.msra.mxu0 0
  %1393 = vmatprep.subr.bf16.mxu0 0
  %1394 = vmatpush1.bf16.msra.mxu0 0
  %1395 = vmatprep.subr.bf16.mxu0 0
  %1396 = vmatpush1.bf16.msra.mxu0 0
  %1397 = vmatprep.subr.bf16.mxu0 0
  %1398 = vmatpush1.bf16.msra.mxu0 0
  %1399 = vmatprep.subr.bf16.mxu0 0
  %1400 = vmatpush1.bf16.msra.mxu0 0
  %1401 = vmatprep.mubr.bf16.mxu0 0
  %1402 = vmatmul.mubr.bf16.gmra.mrb[0].mxu0 %v1367
  %v1403 = vpop.f32.mrb[0].mxu0
  %v1404 = vadd.f32 0.0, %v1403
  %v1405 = vpop.f32.mrb[0].mxu0
  %v1406 = vpop.f32.mrb[0].mxu0
  %v1407 = vpop.f32.mrb[0].mxu0
  %1408 = vdwg.mxu0
  %v1409 = vadd.f32 %v1361, %v1404
  %v1410 = vxor.u32 %v1409, 2147483648
  %v1411 = vmul.f32 %v1410, 1.442695
  %v1412 = vpow.pop %v1411
  %v1413 = vadd.f32 %v1412, 1.0
  %v1414 = vrcp.pop %v1413
  %v1415 = vmul.f32 1.0, %v1414
  %v1416 = vtanh.pop %v1409
  %v1417 = vmul.f32 %v1415, %v1357
  %1419 = vrot.lane.b32.xlu0 %v1416, 64
  %v1420 = vpop.permute.xlu0 %1419
  %v1422 = vmul.f32 %v1415, %v1420
  %1424 = vrot.lane.b32.xlu0 %v1422, 32
  %v1425 = vpop.permute.xlu0 %1424
  %v1427 = vadd.f32 %v1417, %v1425
  %v1428 = vtanh.pop %v1427
  %1430 = vrot.lane.b32.xlu0 %v1428, 64
  %v1431 = vpop.permute.xlu0 %1430
  %v1433 = vmul.f32 %v1415, %v1431
  %1435 = vrot.lane.b32.xlu0 %v1433, 32
  %v1436 = vpop.permute.xlu0 %1435
  %1439 = vrot.lane.b32.xlu0 %v1358, 64
  %v1440 = vpop.permute.xlu0 %1439
  %v1442 = vsel %vm205, %v1436, %v1440
  %v1443 = vpack.c.bf16 %v1442, %v1442
  %v1445 = vsel %vm312, %v1443, 0
  %1447 = vmatprep.subr.bf16.mxu0 0
  %1448 = vmatpush1.bf16.msra.mxu0 %v304
  %1449 = vmatprep.subr.bf16.mxu0 0
  %1450 = vmatpush1.bf16.msra.mxu0 %v305
  %1451 = vmatprep.subr.bf16.mxu0 0
  %1452 = vmatpush1.bf16.msra.mxu0 %v306
  %1453 = vmatprep.subr.bf16.mxu0 0
  %1454 = vmatpush1.bf16.msra.mxu0 %v307
  %1455 = vmatprep.subr.bf16.mxu0 0
  %1456 = vmatpush1.bf16.msra.mxu0 0
  %1457 = vmatprep.subr.bf16.mxu0 0
  %1458 = vmatpush1.bf16.msra.mxu0 0
  %1459 = vmatprep.subr.bf16.mxu0 0
  %1460 = vmatpush1.bf16.msra.mxu0 0
  %1461 = vmatprep.subr.bf16.mxu0 0
  %1462 = vmatpush1.bf16.msra.mxu0 0
  %1463 = vmatprep.subr.bf16.mxu0 0
  %1464 = vmatpush1.bf16.msra.mxu0 0
  %1465 = vmatprep.subr.bf16.mxu0 0
  %1466 = vmatpush1.bf16.msra.mxu0 0
  %1467 = vmatprep.subr.bf16.mxu0 0
  %1468 = vmatpush1.bf16.msra.mxu0 0
  %1469 = vmatprep.subr.bf16.mxu0 0
  %1470 = vmatpush1.bf16.msra.mxu0 0
  %1471 = vmatprep.subr.bf16.mxu0 0
  %1472 = vmatpush1.bf16.msra.mxu0 0
  %1473 = vmatprep.subr.bf16.mxu0 0
  %1474 = vmatpush1.bf16.msra.mxu0 0
  %1475 = vmatprep.subr.bf16.mxu0 0
  %1476 = vmatpush1.bf16.msra.mxu0 0
  %1477 = vmatprep.subr.bf16.mxu0 0
  %1478 = vmatpush1.bf16.msra.mxu0 0
  %1479 = vmatprep.mubr.bf16.mxu0 0
  %1480 = vmatmul.mubr.bf16.gmra.mrb[0].mxu0 %v1445
  %v1481 = vpop.f32.mrb[0].mxu0
  %v1482 = vadd.f32 %v185, %v1481
  %v1483 = vpop.f32.mrb[0].mxu0
  %v1484 = vpop.f32.mrb[0].mxu0
  %v1485 = vpop.f32.mrb[0].mxu0
  %1486 = vdwg.mxu0
  %v1487 = vxor.u32 %v1482, 2147483648
  %v1488 = vmul.f32 %v1487, 1.442695
  %v1489 = vpow.pop %v1488
  %v1490 = vadd.f32 %v1489, 1.0
  %v1491 = vrcp.pop %v1490
  %v1492 = vmul.f32 1.0, %v1491
  %v1493 = vtanh.pop %v1482
  %v1494 = vmul.f32 %v1492, %v1359
  %1496 = vrot.lane.b32.xlu0 %v1493, 64
  %v1497 = vpop.permute.xlu0 %1496
  %v1499 = vmul.f32 %v1492, %v1497
  %1501 = vrot.lane.b32.xlu0 %v1499, 32
  %v1502 = vpop.permute.xlu0 %1501
  %v1504 = vadd.f32 %v1494, %v1502
  %v1505 = vtanh.pop %v1504
  %1507 = vrot.lane.b32.xlu0 %v1505, 64
  %v1508 = vpop.permute.xlu0 %1507
  %v1510 = vmul.f32 %v1492, %v1508
  %s1511 = sadd.s32 %s384, 7
  %p1512 = scmp.lt.s32.totalorder %s1511, 8
  %s1513 = scalar_select %p1512, 1, 0
  %v1514 = vstv %s1513
  %vm1515 = vcmp.eq.s32.totalorder %v1514, 1
  %v1516 = vsel %vm1515, %v1433, %v1356
  %v1517 = vsel %vm1515, %v1427, %v1357
  %v1518 = vsel %vm1515, %v1510, %v1358
  %v1519 = vsel %vm1515, %v1504, %v1359
  %1521 = vrot.lane.b32.xlu0 %v1516, 32
  %v1522 = vpop.permute.xlu0 %1521
  %1524 = vst.msk [vmem:[#allocation3] sm:$0xff] %vm205, %v1522
  %1526 = vrot.lane.b32.xlu0 %v1517, 96
  %v1527 = vpop.permute.xlu0 %1526
  %1529 = vst.msk [vmem:[#allocation4] sm:$0xff] %vm205, %v1527
  %1531 = vrot.lane.b32.xlu0 %v1518, 32
  %v1532 = vpop.permute.xlu0 %1531
  %1534 = vst.msk [vmem:[#allocation5] sm:$0xff] %vm205, %v1532
  %1536 = vrot.lane.b32.xlu0 %v1519, 96
  %v1537 = vpop.permute.xlu0 %1536
  %1539 = vst.msk [vmem:[#allocation6] sm:$0xff] %vm205, %v1537
  // Predicated region
  $region38: #{tpu_custom_call.1} parent=0 // pred_check
    %p1540 = pneg %p30
  $region39: #{tpu_custom_call.1} parent=0 // pred_check_branch
    %1542 = sbr.rel (%p1540) target = $region41
  $region40: #{tpu_custom_call.1} parent=0 // pred_region
    %v1543 = vpack.c.bf16 %v1518, %v1518
    %v1544 = vld [vmem:[%s6] sm:$0xf]
    %v1545 = vld [vmem:[%s6 + $0x4] sm:$0xf]
    %v1546 = vld [vmem:[%s6 + $0x8] sm:$0xf]
    %v1547 = vld [vmem:[%s6 + $0xc] sm:$0xf]
    %v1548 = vld [vmem:[%s7] sm:$0x1]
    %v1550 = vlaneseq
    %v1551 = vshrl.u32 %v1550, 7
    %v1552 = vsub.s32 0, %v1551
    %v1553 = vrot.slane %v1548, %v1552
    %1556 = vrot.lane.b32.xlu0 %v1543, 32
    %v1557 = vpop.permute.xlu0 %1556
    %v1562 = vunpack.c.l.b16 %v1544
    %v1563 = vunpack.c.l.b16 %v1545
    %v1564 = vunpack.c.l.b16 %v1546
    %v1565 = vunpack.c.l.b16 %v1547
    %v1566 = vpack.c.b16 %v1563, %v1562
    %v1567 = vpack.c.b16 %v1565, %v1564
    %v1571 = vsel %vm205, %v1557, 0
    %1573 = vmatprep.subr.bf16.mxu0 0
    %1574 = vmatpush1.bf16.msra.mxu0 %v1566
    %1575 = vmatprep.subr.bf16.mxu0 0
    %1576 = vmatpush1.bf16.msra.mxu0 %v1567
    %1577 = vmatprep.subr.bf16.mxu0 0
    %1578 = vmatpush1.bf16.msra.mxu0 0
    %1579 = vmatprep.subr.bf16.mxu0 0
    %1580 = vmatpush1.bf16.msra.mxu0 0
    %1581 = vmatprep.subr.bf16.mxu0 0
    %1582 = vmatpush1.bf16.msra.mxu0 0
    %1583 = vmatprep.subr.bf16.mxu0 0
    %1584 = vmatpush1.bf16.msra.mxu0 0
    %1585 = vmatprep.subr.bf16.mxu0 0
    %1586 = vmatpush1.bf16.msra.mxu0 0
    %1587 = vmatprep.subr.bf16.mxu0 0
    %1588 = vmatpush1.bf16.msra.mxu0 0
    %1589 = vmatprep.subr.bf16.mxu0 0
    %1590 = vmatpush1.bf16.msra.mxu0 0
    %1591 = vmatprep.subr.bf16.mxu0 0
    %1592 = vmatpush1.bf16.msra.mxu0 0
    %1593 = vmatprep.subr.bf16.mxu0 0
    %1594 = vmatpush1.bf16.msra.mxu0 0
    %1595 = vmatprep.subr.bf16.mxu0 0
    %1596 = vmatpush1.bf16.msra.mxu0 0
    %1597 = vmatprep.subr.bf16.mxu0 0
    %1598 = vmatpush1.bf16.msra.mxu0 0
    %1599 = vmatprep.subr.bf16.mxu0 0
    %1600 = vmatpush1.bf16.msra.mxu0 0
    %1601 = vmatprep.subr.bf16.mxu0 0
    %1602 = vmatpush1.bf16.msra.mxu0 0
    %1603 = vmatprep.subr.bf16.mxu0 0
    %1604 = vmatpush1.bf16.msra.mxu0 0
    %1605 = vmatprep.mubr.bf16.mxu0 0
    %1606 = vmatmul.mubr.bf16.gmra.mrb[0].mxu0 %v1571
    %v1607 = vpop.f32.mrb[0].mxu0
    %v1608 = vadd.f32 %v1553, %v1607
    %v1609 = vpop.f32.mrb[0].mxu0
    %v1610 = vpop.f32.mrb[0].mxu0
    %v1611 = vpop.f32.mrb[0].mxu0
    %1612 = vdwg.mxu0
    %vm1613 = vcmask 31744
    %v1614 = vsel %vm1613, %v1608, -inf
    %1615 = vmax.xlane.f32.xlu0 %v1614
    %v1616 = vpop.xlane.xlu0 %1615
    %v1617 = vsub.f32 %v1608, %v1616
    %v1618 = vmul.f32 %v1617, 1.442695
    %v1619 = vpow.pop %v1618
    %v1620 = vsel %vm1613, %v1619, 0.0
    %1621 = vadd.xlane.f32.xlu0 %v1620
    %v1622 = vpop.xlane.xlu0 %1621
    %v1623 = vlog2.pop %v1622
    %v1624 = vmul.f32 %v1623, 0.6931472
    %v1625 = vsub.f32 %v1617, %v1624
    %1626 = vst.msk [vmem:[%s8] sm:$0xff] %vm1613, %v1625
  $region41: #{tpu_custom_call.1} parent=0 // pred_fallthru
    _
  // Predicated region
  $region42: #{tpu_custom_call.1} parent=0 // pred_check
    _
  $region43: #{tpu_custom_call.1} parent=0 // pred_check_branch
    %1628 = sbr.rel (0) target = $region45
  $region44: #{tpu_custom_call.1} parent=0 // pred_region
    _
  $region45: #{tpu_custom_call.1} parent=0 // pred_fallthru
    _
  // Predicated region
  $region46: #{tpu_custom_call.1} parent=0 // pred_check
    _
  $region47: #{tpu_custom_call.1} parent=0 // pred_check_branch
    %1630 = sbr.rel (0) target = $region49
  $region48: #{tpu_custom_call.1} parent=0 // pred_region
    _
  $region49: #{tpu_custom_call.1} parent=0 // pred_fallthru
    _

</llo_original>
